<compile_context>
chip_gen: v7x
topology: tpu7x:2x2x1
jax: 0.10.0
libtpu: 0.0.40
codegen_flags: <defaults>
</compile_context>

<pallas_src>
import jax
import jax.numpy as jnp
from jax import lax
from jax.experimental import pallas as pl
from jax.experimental.pallas import tpu as pltpu  # noqa: F401  (TPU backend)

E = 10                      # embed_dim
H = 2                       # num_heads
DH = E // H                 # head_dim = 5
EPS = 1e-5                  # PyTorch LayerNorm default eps
SCALE = 1.0 / float(DH) ** 0.5
LANE = 128                  # lane-slot width for packed weights

# w_in lane-slot layout (13 slots of 128 lanes, pre-transposed, zero-padded):
#   slots 0..5  : layer-1 [Wq_h0, Wk_h0, Wv_h0, Wq_h1, Wk_h1, Wv_h1]
#   slots 6..11 : layer-2 (same order)
#   slot 12     : final Linear weight (transposed)
N_IN_SLOTS = 13
LIN_SLOT = 12
# b_misc row layout (dense (9, E) slab):
#   0: out_proj bias layer 1, 1: out_proj bias layer 2,
#   2,3: LN1 w,b   4,5: LN2 w,b   6,7: LN3 w,b   8: Linear bias
LN1, LN2, LN3, B_LIN = 2, 4, 6, 8


# ----------------------------------------------------------------------------- kernel
def transformer_kernel(x_ref, w_in_ref, w_out_ref, b_in_ref, b_misc_ref, o_ref):
    Bb, Ss, Ee = x_ref.shape
    n = Bb * Ss
    x = x_ref[...].reshape(n, Ee)                      # (N, E), tile-aligned reshape

    def layer_norm(y, gi):
        # PyTorch LayerNorm: biased variance over last dim, eps=1e-5, affine.
        mu = jnp.mean(y, axis=-1, keepdims=True)
        var = jnp.mean((y - mu) ** 2, axis=-1, keepdims=True)
        g = b_misc_ref[gi:gi + 1, :]                   # (1, E)
        b = b_misc_ref[gi + 1:gi + 2, :]
        return (y - mu) * lax.rsqrt(var + EPS) * g + b

    def mha(y, layer):
        # One fused QKV projection: (N, E) @ (E, 6*128) + fused bias row.
        wqkv = w_in_ref[:, layer * 6 * LANE:(layer + 1) * 6 * LANE]      # (E, 768)
        qkv = jnp.dot(y, wqkv, preferred_element_type=jnp.float32) \
            + b_in_ref[layer:layer + 1, :]                               # (N, 768)
        head_outs = []
        for h in range(H):
            off = h * 3 * LANE
            # Full 128-lane slot slices: lanes >= DH are exact zeros (weights & bias
            # were zero-padded host-side), so they contribute nothing to the dots.
            qh = qkv[:, off + 0 * LANE: off + 1 * LANE].reshape(Bb, Ss, LANE)
            kh = qkv[:, off + 1 * LANE: off + 2 * LANE].reshape(Bb, Ss, LANE)
            vh = qkv[:, off + 2 * LANE: off + 3 * LANE].reshape(Bb, Ss, LANE)
            s = jnp.einsum("bqd,bkd->bqk", qh, kh,
                           preferred_element_type=jnp.float32) * SCALE
            m = jnp.max(s, axis=-1, keepdims=True)
            e = jnp.exp(s - m)
            p = e / jnp.sum(e, axis=-1, keepdims=True)   # exact softmax
            # TODO(synk): attention-weight dropout (p=0.1) omitted — eval-mode semantics.
            oh = jnp.einsum("bqk,bkd->bqd", p, vh,
                            preferred_element_type=jnp.float32)          # (B,S,128)
            head_outs.append(oh.reshape(n, LANE))
        heads = jnp.concatenate(head_outs, axis=-1)      # (N, 2*128), lane-group aligned
        wo = w_out_ref[layer * H * LANE:(layer + 1) * H * LANE, :]       # (256, E)
        return jnp.dot(heads, wo, preferred_element_type=jnp.float32) \
            + b_misc_ref[layer:layer + 1, :]             # out_proj bias

    out = mha(x, 0)
    out = x + layer_norm(out, LN1)
    out2 = mha(out, 1)
    out = out2 + layer_norm(out2, LN2)
    wlin = w_in_ref[:, LIN_SLOT * LANE: LIN_SLOT * LANE + Ee]            # (E, E)
    out = jnp.dot(out, wlin, preferred_element_type=jnp.float32) \
        + b_misc_ref[B_LIN:B_LIN + 1, :]
    out = out + layer_norm(out, LN3)
    o_ref[...] = out.reshape(Bb, Ss, Ee)


def self_attention_transformer(x, w_in, w_out, b_in, b_misc):
    args = (x, w_in, w_out, b_in, b_misc)
    # Everything is tiny, so each array is one full-size VMEM block (no grid).
    in_specs = [pl.BlockSpec(a.shape, lambda *_, nd=a.ndim: (0,) * nd) for a in args]
    out_specs = pl.BlockSpec(x.shape, lambda *_: (0,) * x.ndim)
    return pl.pallas_call(
        transformer_kernel,
        out_shape=jax.ShapeDtypeStruct(x.shape, jnp.float32),
        in_specs=in_specs,
        out_specs=out_specs,
        input_output_aliases={0: 0},    # output reuses x's HBM buffer
    )(*args)


# ----------------------------------------------------------- host-side parameter packing
def make_params(key):
    """Parameters in native PyTorch layout (in_proj (3E,E), out_proj (E,E), etc.)."""
    ks = jax.random.split(key, 16)

    def w(k, shape, scale=0.1):
        return (scale * jax.random.normal(k, shape)).astype(jnp.float32)

    return dict(
        w_in1=w(ks[0], (3 * E, E)), b_in1=w(ks[1], (3 * E,)),
        w_out1=w(ks[2], (E, E)),    b_out1=w(ks[3], (E,)),
        w_in2=w(ks[4], (3 * E, E)), b_in2=w(ks[5], (3 * E,)),
        w_out2=w(ks[6], (E, E)),    b_out2=w(ks[7], (E,)),
        ln1_w=1.0 + w(ks[8], (E,)),  ln1_b=w(ks[9], (E,)),
        ln2_w=1.0 + w(ks[10], (E,)), ln2_b=w(ks[11], (E,)),
        ln3_w=1.0 + w(ks[12], (E,)), ln3_b=w(ks[13], (E,)),
        lin_w=w(ks[14], (E, E)),    lin_b=w(ks[15], (E,)),
    )


def pack_params(p):
    """Pre-transpose, split per head/Q-K-V, place each matrix in its own 128-lane slot."""
    w_in = jnp.zeros((E, N_IN_SLOTS * LANE), jnp.float32)      # (10, 1664)
    b_in = jnp.zeros((2, 6 * LANE), jnp.float32)               # (2, 768) fused QKV bias
    w_out = jnp.zeros((2 * H * LANE, E), jnp.float32)          # (512, 10) fused out-proj

    layers = ((p["w_in1"], p["b_in1"], p["w_out1"]),
              (p["w_in2"], p["b_in2"], p["w_out2"]))
    for layer, (wi, bi, wo) in enumerate(layers):
        for h in range(H):
            for j, base in enumerate((0, E, 2 * E)):           # q, k, v row blocks
                slot = layer * 6 + h * 3 + j
                wm = wi[base + h * DH: base + (h + 1) * DH, :]              # (DH, E)
                w_in = w_in.at[:, slot * LANE: slot * LANE + DH].set(wm.T)
                bm = bi[base + h * DH: base + (h + 1) * DH]                 # (DH,)
                col = (h * 3 + j) * LANE
                b_in = b_in.at[layer, col: col + DH].set(bm)
            # out_proj columns for head h, transposed, into rows [.. : ..+DH] of its slot
            woh = wo[:, h * DH: (h + 1) * DH].T                             # (DH, E)
            row0 = (layer * H + h) * LANE
            w_out = w_out.at[row0: row0 + DH, :].set(woh)
    w_in = w_in.at[:, LIN_SLOT * LANE: LIN_SLOT * LANE + E].set(p["lin_w"].T)

    b_misc = jnp.stack([p["b_out1"], p["b_out2"],
                        p["ln1_w"], p["ln1_b"], p["ln2_w"], p["ln2_b"],
                        p["ln3_w"], p["ln3_b"], p["lin_b"]])                # (9, E)
    return w_in, w_out, b_in, b_misc


# -------------------------------------------------- pure-JAX reference (PyTorch layout)
def _ref_layer_norm(x, g, b):
    mu = jnp.mean(x, axis=-1, keepdims=True)
    var = jnp.mean((x - mu) ** 2, axis=-1, keepdims=True)
    return (x - mu) * lax.rsqrt(var + EPS) * g + b


def _ref_mha(x, w_in, b_in, w_out, b_out):
    # Mirrors nn.MultiheadAttention math on the native (3E,E)/(E,E) weights
    # (independent of the kernel's packed / per-head formulation).
    qkv = jnp.einsum("bse,fe->bsf", x, w_in) + b_in
    q, k, v = qkv[..., :E], qkv[..., E:2 * E], qkv[..., 2 * E:]
    heads = []
    for h in range(H):
        sl = slice(h * DH, (h + 1) * DH)
        s = jnp.einsum("bqd,bkd->bqk", q[..., sl], k[..., sl]) * SCALE
        p = jax.nn.softmax(s, axis=-1)
        heads.append(jnp.einsum("bqk,bkd->bqd", p, v[..., sl]))
    attn = jnp.concatenate(heads, axis=-1)
    return jnp.einsum("bse,fe->bsf", attn, w_out) + b_out


def reference_forward(x, p):
    out = _ref_mha(x, p["w_in1"], p["b_in1"], p["w_out1"], p["b_out1"])
    out = x + _ref_layer_norm(out, p["ln1_w"], p["ln1_b"])
    out2 = _ref_mha(out, p["w_in2"], p["b_in2"], p["w_out2"], p["b_out2"])
    out = out2 + _ref_layer_norm(out2, p["ln2_w"], p["ln2_b"])
    out = jnp.einsum("bse,fe->bsf", out, p["lin_w"]) + p["lin_b"]
    out = out + _ref_layer_norm(out, p["ln3_w"], p["ln3_b"])
    return out


if __name__ == "__main__":
    key = jax.random.PRNGKey(0)
    k_x, k_p = jax.random.split(key)
    B, S = 2, 8
    x = jax.random.normal(k_x, (B, S, E), dtype=jnp.float32)
    params = make_params(k_p)
    w_in, w_out, b_in, b_misc = pack_params(params)

    # Reference is computed BEFORE the kernel call: the kernel aliases/donates x's buffer.
    ref = jax.block_until_ready(reference_forward(x, params))

    out = self_attention_transformer(x, w_in, w_out, b_in, b_misc)
    out = jax.block_until_ready(out)

    assert out.shape == (B, S, E)
    # Exact softmax in-kernel -> tight tolerance (only MXU accumulation-order noise left).
    assert jnp.allclose(out, ref, atol=1e-4, rtol=1e-4), "mismatch vs reference"

    print("KERNEL_OK")
</pallas_src>

<mosaic_0001>
module attributes {stable_mosaic.version = 11 : i64} {
  func.func @transformer_kernel(%arg0: memref<2x8x10xf32, #tpu.memory_space<vmem>>, %arg1: memref<10x1664xf32, #tpu.memory_space<vmem>>, %arg2: memref<512x10xf32, #tpu.memory_space<vmem>>, %arg3: memref<2x768xf32, #tpu.memory_space<vmem>>, %arg4: memref<9x10xf32, #tpu.memory_space<vmem>>, %arg5: memref<2x8x10xf32, #tpu.memory_space<vmem>>) attributes {dimension_semantics = [], scalar_prefetch = 0 : i64, scratch_operands = 0 : i64, tpu.core_type = #tpu.core_type<tc>} {
    %c0 = arith.constant 0 : index
    %c0_0 = arith.constant 0 : index
    %c0_1 = arith.constant 0 : index
    %0 = vector.load %arg0[%c0, %c0_0, %c0_1] : memref<2x8x10xf32, #tpu.memory_space<vmem>>, vector<2x8x10xf32>
    %1 = vector.shape_cast %0 : vector<2x8x10xf32> to vector<16x10xf32>
    %c0_2 = arith.constant 0 : index
    %c0_3 = arith.constant 0 : index
    %2 = vector.load %arg1[%c0_2, %c0_3] : memref<10x1664xf32, #tpu.memory_space<vmem>>, vector<10x768xf32>
    %cst = arith.constant dense<0.000000e+00> : vector<16x768xf32>
    %3 = tpu.matmul %1, %2, %cst {dimension_numbers = #tpu.dot_dimension_numbers<[1], [0], [0], [1], [0, 0, 1, 1], [], []>} : vector<16x10xf32>, vector<10x768xf32>, vector<16x768xf32> -> vector<16x768xf32>
    %c0_4 = arith.constant 0 : index
    %c0_5 = arith.constant 0 : index
    %4 = vector.load %arg3[%c0_4, %c0_5] : memref<2x768xf32, #tpu.memory_space<vmem>>, vector<1x768xf32>
    %5 = vector.broadcast %4 : vector<1x768xf32> to vector<16x768xf32>
    %6 = arith.addf %3, %5 : vector<16x768xf32>
    %7 = vector.extract_strided_slice %6 {offsets = [0, 0], sizes = [16, 128], strides = [1, 1]} : vector<16x768xf32> to vector<16x128xf32>
    %8 = vector.shape_cast %7 : vector<16x128xf32> to vector<2x8x128xf32>
    %9 = vector.extract_strided_slice %6 {offsets = [0, 128], sizes = [16, 128], strides = [1, 1]} : vector<16x768xf32> to vector<16x128xf32>
    %10 = vector.shape_cast %9 : vector<16x128xf32> to vector<2x8x128xf32>
    %11 = vector.extract_strided_slice %6 {offsets = [0, 256], sizes = [16, 128], strides = [1, 1]} : vector<16x768xf32> to vector<16x128xf32>
    %12 = vector.shape_cast %11 : vector<16x128xf32> to vector<2x8x128xf32>
    "tpu.trace_start"() <{level = 10 : i32, message = "bqd,bkd->bqk"}> : () -> ()
    %cst_6 = arith.constant dense<0.000000e+00> : vector<2x8x8xf32>
    %13 = tpu.matmul %8, %10, %cst_6 {dimension_numbers = #tpu.dot_dimension_numbers<[2], [2], [1], [1], [0, 0, 0, 1, 1, 1], [0], [0]>} : vector<2x8x128xf32>, vector<2x8x128xf32>, vector<2x8x8xf32> -> vector<2x8x8xf32>
    "tpu.trace_stop"() : () -> ()
    %cst_7 = arith.constant 0.44721359 : f32
    %14 = vector.broadcast %cst_7 : f32 to vector<2x8x8xf32>
    %15 = arith.mulf %13, %14 : vector<2x8x8xf32>
    %cst_8 = arith.constant dense<0xFF800000> : vector<2x8xf32>
    %16 = vector.multi_reduction <maximumf>, %15, %cst_8 [2] : vector<2x8x8xf32> to vector<2x8xf32>
    %17 = vector.shape_cast %16 : vector<2x8xf32> to vector<2x8x1xf32>
    %18 = vector.broadcast %17 : vector<2x8x1xf32> to vector<2x8x8xf32>
    %19 = arith.subf %15, %18 : vector<2x8x8xf32>
    %20 = math.exp %19 : vector<2x8x8xf32>
    %cst_9 = arith.constant dense<0.000000e+00> : vector<2x8xf32>
    %21 = vector.multi_reduction <add>, %20, %cst_9 [2] : vector<2x8x8xf32> to vector<2x8xf32>
    %22 = vector.shape_cast %21 : vector<2x8xf32> to vector<2x8x1xf32>
    %23 = vector.broadcast %22 : vector<2x8x1xf32> to vector<2x8x8xf32>
    %24 = arith.divf %20, %23 : vector<2x8x8xf32>
    "tpu.trace_start"() <{level = 10 : i32, message = "bqk,bkd->bqd"}> : () -> ()
    %cst_10 = arith.constant dense<0.000000e+00> : vector<2x8x128xf32>
    %25 = tpu.matmul %24, %12, %cst_10 {dimension_numbers = #tpu.dot_dimension_numbers<[2], [1], [1], [2], [0, 0, 0, 1, 1, 2], [0], [0]>} : vector<2x8x8xf32>, vector<2x8x128xf32>, vector<2x8x128xf32> -> vector<2x8x128xf32>
    "tpu.trace_stop"() : () -> ()
    %26 = vector.shape_cast %25 : vector<2x8x128xf32> to vector<16x128xf32>
    %27 = vector.extract_strided_slice %6 {offsets = [0, 384], sizes = [16, 128], strides = [1, 1]} : vector<16x768xf32> to vector<16x128xf32>
    %28 = vector.shape_cast %27 : vector<16x128xf32> to vector<2x8x128xf32>
    %29 = vector.extract_strided_slice %6 {offsets = [0, 512], sizes = [16, 128], strides = [1, 1]} : vector<16x768xf32> to vector<16x128xf32>
    %30 = vector.shape_cast %29 : vector<16x128xf32> to vector<2x8x128xf32>
    %31 = vector.extract_strided_slice %6 {offsets = [0, 640], sizes = [16, 128], strides = [1, 1]} : vector<16x768xf32> to vector<16x128xf32>
    %32 = vector.shape_cast %31 : vector<16x128xf32> to vector<2x8x128xf32>
    "tpu.trace_start"() <{level = 10 : i32, message = "bqd,bkd->bqk"}> : () -> ()
    %cst_11 = arith.constant dense<0.000000e+00> : vector<2x8x8xf32>
    %33 = tpu.matmul %28, %30, %cst_11 {dimension_numbers = #tpu.dot_dimension_numbers<[2], [2], [1], [1], [0, 0, 0, 1, 1, 1], [0], [0]>} : vector<2x8x128xf32>, vector<2x8x128xf32>, vector<2x8x8xf32> -> vector<2x8x8xf32>
    "tpu.trace_stop"() : () -> ()
    %cst_12 = arith.constant 0.44721359 : f32
    %34 = vector.broadcast %cst_12 : f32 to vector<2x8x8xf32>
    %35 = arith.mulf %33, %34 : vector<2x8x8xf32>
    %cst_13 = arith.constant dense<0xFF800000> : vector<2x8xf32>
    %36 = vector.multi_reduction <maximumf>, %35, %cst_13 [2] : vector<2x8x8xf32> to vector<2x8xf32>
    %37 = vector.shape_cast %36 : vector<2x8xf32> to vector<2x8x1xf32>
    %38 = vector.broadcast %37 : vector<2x8x1xf32> to vector<2x8x8xf32>
    %39 = arith.subf %35, %38 : vector<2x8x8xf32>
    %40 = math.exp %39 : vector<2x8x8xf32>
    %cst_14 = arith.constant dense<0.000000e+00> : vector<2x8xf32>
    %41 = vector.multi_reduction <add>, %40, %cst_14 [2] : vector<2x8x8xf32> to vector<2x8xf32>
    %42 = vector.shape_cast %41 : vector<2x8xf32> to vector<2x8x1xf32>
    %43 = vector.broadcast %42 : vector<2x8x1xf32> to vector<2x8x8xf32>
    %44 = arith.divf %40, %43 : vector<2x8x8xf32>
    "tpu.trace_start"() <{level = 10 : i32, message = "bqk,bkd->bqd"}> : () -> ()
    %cst_15 = arith.constant dense<0.000000e+00> : vector<2x8x128xf32>
    %45 = tpu.matmul %44, %32, %cst_15 {dimension_numbers = #tpu.dot_dimension_numbers<[2], [1], [1], [2], [0, 0, 0, 1, 1, 2], [0], [0]>} : vector<2x8x8xf32>, vector<2x8x128xf32>, vector<2x8x128xf32> -> vector<2x8x128xf32>
    "tpu.trace_stop"() : () -> ()
    %46 = vector.shape_cast %45 : vector<2x8x128xf32> to vector<16x128xf32>
    %47 = tpu.concatenate %26, %46 in 1 : vector<16x128xf32>, vector<16x128xf32> -> vector<16x256xf32>
    %c0_16 = arith.constant 0 : index
    %c0_17 = arith.constant 0 : index
    %48 = vector.load %arg2[%c0_16, %c0_17] : memref<512x10xf32, #tpu.memory_space<vmem>>, vector<256x10xf32>
    %cst_18 = arith.constant dense<0.000000e+00> : vector<16x10xf32>
    %49 = tpu.matmul %47, %48, %cst_18 {dimension_numbers = #tpu.dot_dimension_numbers<[1], [0], [0], [1], [0, 0, 1, 1], [], []>} : vector<16x256xf32>, vector<256x10xf32>, vector<16x10xf32> -> vector<16x10xf32>
    %c0_19 = arith.constant 0 : index
    %c0_20 = arith.constant 0 : index
    %50 = vector.load %arg4[%c0_19, %c0_20] : memref<9x10xf32, #tpu.memory_space<vmem>>, vector<1x10xf32>
    %51 = vector.broadcast %50 : vector<1x10xf32> to vector<16x10xf32>
    %52 = arith.addf %49, %51 : vector<16x10xf32>
    %cst_21 = arith.constant dense<0.000000e+00> : vector<16xf32>
    %53 = vector.multi_reduction <add>, %52, %cst_21 [1] : vector<16x10xf32> to vector<16xf32>
    %54 = vector.shape_cast %53 : vector<16xf32> to vector<16x1xf32>
    %cst_22 = arith.constant 1.000000e+01 : f32
    %55 = vector.broadcast %cst_22 : f32 to vector<16x1xf32>
    %56 = arith.divf %54, %55 : vector<16x1xf32>
    %57 = vector.broadcast %56 : vector<16x1xf32> to vector<16x10xf32>
    %58 = arith.subf %52, %57 : vector<16x10xf32>
    %59 = arith.mulf %58, %58 : vector<16x10xf32>
    %cst_23 = arith.constant dense<0.000000e+00> : vector<16xf32>
    %60 = vector.multi_reduction <add>, %59, %cst_23 [1] : vector<16x10xf32> to vector<16xf32>
    %61 = vector.shape_cast %60 : vector<16xf32> to vector<16x1xf32>
    %cst_24 = arith.constant 1.000000e+01 : f32
    %62 = vector.broadcast %cst_24 : f32 to vector<16x1xf32>
    %63 = arith.divf %61, %62 : vector<16x1xf32>
    %c2 = arith.constant 2 : index
    %c0_25 = arith.constant 0 : index
    %64 = vector.load %arg4[%c2, %c0_25] : memref<9x10xf32, #tpu.memory_space<vmem>>, vector<1x10xf32>
    %c3 = arith.constant 3 : index
    %c0_26 = arith.constant 0 : index
    %65 = vector.load %arg4[%c3, %c0_26] : memref<9x10xf32, #tpu.memory_space<vmem>>, vector<1x10xf32>
    %66 = vector.broadcast %56 : vector<16x1xf32> to vector<16x10xf32>
    %67 = arith.subf %52, %66 : vector<16x10xf32>
    %cst_27 = arith.constant 9.99999974E-6 : f32
    %68 = vector.broadcast %cst_27 : f32 to vector<16x1xf32>
    %69 = arith.addf %63, %68 : vector<16x1xf32>
    %70 = math.rsqrt %69 : vector<16x1xf32>
    %71 = vector.broadcast %70 : vector<16x1xf32> to vector<16x10xf32>
    %72 = arith.mulf %67, %71 : vector<16x10xf32>
    %73 = vector.broadcast %64 : vector<1x10xf32> to vector<16x10xf32>
    %74 = arith.mulf %72, %73 : vector<16x10xf32>
    %75 = vector.broadcast %65 : vector<1x10xf32> to vector<16x10xf32>
    %76 = arith.addf %74, %75 : vector<16x10xf32>
    %77 = arith.addf %1, %76 : vector<16x10xf32>
    %c0_28 = arith.constant 0 : index
    %c768 = arith.constant 768 : index
    %78 = vector.load %arg1[%c0_28, %c768] : memref<10x1664xf32, #tpu.memory_space<vmem>>, vector<10x768xf32>
    %cst_29 = arith.constant dense<0.000000e+00> : vector<16x768xf32>
    %79 = tpu.matmul %77, %78, %cst_29 {dimension_numbers = #tpu.dot_dimension_numbers<[1], [0], [0], [1], [0, 0, 1, 1], [], []>} : vector<16x10xf32>, vector<10x768xf32>, vector<16x768xf32> -> vector<16x768xf32>
    %c1 = arith.constant 1 : index
    %c0_30 = arith.constant 0 : index
    %80 = vector.load %arg3[%c1, %c0_30] : memref<2x768xf32, #tpu.memory_space<vmem>>, vector<1x768xf32>
    %81 = vector.broadcast %80 : vector<1x768xf32> to vector<16x768xf32>
    %82 = arith.addf %79, %81 : vector<16x768xf32>
    %83 = vector.extract_strided_slice %82 {offsets = [0, 0], sizes = [16, 128], strides = [1, 1]} : vector<16x768xf32> to vector<16x128xf32>
    %84 = vector.shape_cast %83 : vector<16x128xf32> to vector<2x8x128xf32>
    %85 = vector.extract_strided_slice %82 {offsets = [0, 128], sizes = [16, 128], strides = [1, 1]} : vector<16x768xf32> to vector<16x128xf32>
    %86 = vector.shape_cast %85 : vector<16x128xf32> to vector<2x8x128xf32>
    %87 = vector.extract_strided_slice %82 {offsets = [0, 256], sizes = [16, 128], strides = [1, 1]} : vector<16x768xf32> to vector<16x128xf32>
    %88 = vector.shape_cast %87 : vector<16x128xf32> to vector<2x8x128xf32>
    "tpu.trace_start"() <{level = 10 : i32, message = "bqd,bkd->bqk"}> : () -> ()
    %cst_31 = arith.constant dense<0.000000e+00> : vector<2x8x8xf32>
    %89 = tpu.matmul %84, %86, %cst_31 {dimension_numbers = #tpu.dot_dimension_numbers<[2], [2], [1], [1], [0, 0, 0, 1, 1, 1], [0], [0]>} : vector<2x8x128xf32>, vector<2x8x128xf32>, vector<2x8x8xf32> -> vector<2x8x8xf32>
    "tpu.trace_stop"() : () -> ()
    %cst_32 = arith.constant 0.44721359 : f32
    %90 = vector.broadcast %cst_32 : f32 to vector<2x8x8xf32>
    %91 = arith.mulf %89, %90 : vector<2x8x8xf32>
    %cst_33 = arith.constant dense<0xFF800000> : vector<2x8xf32>
    %92 = vector.multi_reduction <maximumf>, %91, %cst_33 [2] : vector<2x8x8xf32> to vector<2x8xf32>
    %93 = vector.shape_cast %92 : vector<2x8xf32> to vector<2x8x1xf32>
    %94 = vector.broadcast %93 : vector<2x8x1xf32> to vector<2x8x8xf32>
    %95 = arith.subf %91, %94 : vector<2x8x8xf32>
    %96 = math.exp %95 : vector<2x8x8xf32>
    %cst_34 = arith.constant dense<0.000000e+00> : vector<2x8xf32>
    %97 = vector.multi_reduction <add>, %96, %cst_34 [2] : vector<2x8x8xf32> to vector<2x8xf32>
    %98 = vector.shape_cast %97 : vector<2x8xf32> to vector<2x8x1xf32>
    %99 = vector.broadcast %98 : vector<2x8x1xf32> to vector<2x8x8xf32>
    %100 = arith.divf %96, %99 : vector<2x8x8xf32>
    "tpu.trace_start"() <{level = 10 : i32, message = "bqk,bkd->bqd"}> : () -> ()
    %cst_35 = arith.constant dense<0.000000e+00> : vector<2x8x128xf32>
    %101 = tpu.matmul %100, %88, %cst_35 {dimension_numbers = #tpu.dot_dimension_numbers<[2], [1], [1], [2], [0, 0, 0, 1, 1, 2], [0], [0]>} : vector<2x8x8xf32>, vector<2x8x128xf32>, vector<2x8x128xf32> -> vector<2x8x128xf32>
    "tpu.trace_stop"() : () -> ()
    %102 = vector.shape_cast %101 : vector<2x8x128xf32> to vector<16x128xf32>
    %103 = vector.extract_strided_slice %82 {offsets = [0, 384], sizes = [16, 128], strides = [1, 1]} : vector<16x768xf32> to vector<16x128xf32>
    %104 = vector.shape_cast %103 : vector<16x128xf32> to vector<2x8x128xf32>
    %105 = vector.extract_strided_slice %82 {offsets = [0, 512], sizes = [16, 128], strides = [1, 1]} : vector<16x768xf32> to vector<16x128xf32>
    %106 = vector.shape_cast %105 : vector<16x128xf32> to vector<2x8x128xf32>
    %107 = vector.extract_strided_slice %82 {offsets = [0, 640], sizes = [16, 128], strides = [1, 1]} : vector<16x768xf32> to vector<16x128xf32>
    %108 = vector.shape_cast %107 : vector<16x128xf32> to vector<2x8x128xf32>
    "tpu.trace_start"() <{level = 10 : i32, message = "bqd,bkd->bqk"}> : () -> ()
    %cst_36 = arith.constant dense<0.000000e+00> : vector<2x8x8xf32>
    %109 = tpu.matmul %104, %106, %cst_36 {dimension_numbers = #tpu.dot_dimension_numbers<[2], [2], [1], [1], [0, 0, 0, 1, 1, 1], [0], [0]>} : vector<2x8x128xf32>, vector<2x8x128xf32>, vector<2x8x8xf32> -> vector<2x8x8xf32>
    "tpu.trace_stop"() : () -> ()
    %cst_37 = arith.constant 0.44721359 : f32
    %110 = vector.broadcast %cst_37 : f32 to vector<2x8x8xf32>
    %111 = arith.mulf %109, %110 : vector<2x8x8xf32>
    %cst_38 = arith.constant dense<0xFF800000> : vector<2x8xf32>
    %112 = vector.multi_reduction <maximumf>, %111, %cst_38 [2] : vector<2x8x8xf32> to vector<2x8xf32>
    %113 = vector.shape_cast %112 : vector<2x8xf32> to vector<2x8x1xf32>
    %114 = vector.broadcast %113 : vector<2x8x1xf32> to vector<2x8x8xf32>
    %115 = arith.subf %111, %114 : vector<2x8x8xf32>
    %116 = math.exp %115 : vector<2x8x8xf32>
    %cst_39 = arith.constant dense<0.000000e+00> : vector<2x8xf32>
    %117 = vector.multi_reduction <add>, %116, %cst_39 [2] : vector<2x8x8xf32> to vector<2x8xf32>
    %118 = vector.shape_cast %117 : vector<2x8xf32> to vector<2x8x1xf32>
    %119 = vector.broadcast %118 : vector<2x8x1xf32> to vector<2x8x8xf32>
    %120 = arith.divf %116, %119 : vector<2x8x8xf32>
    "tpu.trace_start"() <{level = 10 : i32, message = "bqk,bkd->bqd"}> : () -> ()
    %cst_40 = arith.constant dense<0.000000e+00> : vector<2x8x128xf32>
    %121 = tpu.matmul %120, %108, %cst_40 {dimension_numbers = #tpu.dot_dimension_numbers<[2], [1], [1], [2], [0, 0, 0, 1, 1, 2], [0], [0]>} : vector<2x8x8xf32>, vector<2x8x128xf32>, vector<2x8x128xf32> -> vector<2x8x128xf32>
    "tpu.trace_stop"() : () -> ()
    %122 = vector.shape_cast %121 : vector<2x8x128xf32> to vector<16x128xf32>
    %123 = tpu.concatenate %102, %122 in 1 : vector<16x128xf32>, vector<16x128xf32> -> vector<16x256xf32>
    %c256 = arith.constant 256 : index
    %c0_41 = arith.constant 0 : index
    %124 = vector.load %arg2[%c256, %c0_41] : memref<512x10xf32, #tpu.memory_space<vmem>>, vector<256x10xf32>
    %cst_42 = arith.constant dense<0.000000e+00> : vector<16x10xf32>
    %125 = tpu.matmul %123, %124, %cst_42 {dimension_numbers = #tpu.dot_dimension_numbers<[1], [0], [0], [1], [0, 0, 1, 1], [], []>} : vector<16x256xf32>, vector<256x10xf32>, vector<16x10xf32> -> vector<16x10xf32>
    %c1_43 = arith.constant 1 : index
    %c0_44 = arith.constant 0 : index
    %126 = vector.load %arg4[%c1_43, %c0_44] : memref<9x10xf32, #tpu.memory_space<vmem>>, vector<1x10xf32>
    %127 = vector.broadcast %126 : vector<1x10xf32> to vector<16x10xf32>
    %128 = arith.addf %125, %127 : vector<16x10xf32>
    %cst_45 = arith.constant dense<0.000000e+00> : vector<16xf32>
    %129 = vector.multi_reduction <add>, %128, %cst_45 [1] : vector<16x10xf32> to vector<16xf32>
    %130 = vector.shape_cast %129 : vector<16xf32> to vector<16x1xf32>
    %cst_46 = arith.constant 1.000000e+01 : f32
    %131 = vector.broadcast %cst_46 : f32 to vector<16x1xf32>
    %132 = arith.divf %130, %131 : vector<16x1xf32>
    %133 = vector.broadcast %132 : vector<16x1xf32> to vector<16x10xf32>
    %134 = arith.subf %128, %133 : vector<16x10xf32>
    %135 = arith.mulf %134, %134 : vector<16x10xf32>
    %cst_47 = arith.constant dense<0.000000e+00> : vector<16xf32>
    %136 = vector.multi_reduction <add>, %135, %cst_47 [1] : vector<16x10xf32> to vector<16xf32>
    %137 = vector.shape_cast %136 : vector<16xf32> to vector<16x1xf32>
    %cst_48 = arith.constant 1.000000e+01 : f32
    %138 = vector.broadcast %cst_48 : f32 to vector<16x1xf32>
    %139 = arith.divf %137, %138 : vector<16x1xf32>
    %c4 = arith.constant 4 : index
    %c0_49 = arith.constant 0 : index
    %140 = vector.load %arg4[%c4, %c0_49] : memref<9x10xf32, #tpu.memory_space<vmem>>, vector<1x10xf32>
    %c5 = arith.constant 5 : index
    %c0_50 = arith.constant 0 : index
    %141 = vector.load %arg4[%c5, %c0_50] : memref<9x10xf32, #tpu.memory_space<vmem>>, vector<1x10xf32>
    %142 = vector.broadcast %132 : vector<16x1xf32> to vector<16x10xf32>
    %143 = arith.subf %128, %142 : vector<16x10xf32>
    %cst_51 = arith.constant 9.99999974E-6 : f32
    %144 = vector.broadcast %cst_51 : f32 to vector<16x1xf32>
    %145 = arith.addf %139, %144 : vector<16x1xf32>
    %146 = math.rsqrt %145 : vector<16x1xf32>
    %147 = vector.broadcast %146 : vector<16x1xf32> to vector<16x10xf32>
    %148 = arith.mulf %143, %147 : vector<16x10xf32>
    %149 = vector.broadcast %140 : vector<1x10xf32> to vector<16x10xf32>
    %150 = arith.mulf %148, %149 : vector<16x10xf32>
    %151 = vector.broadcast %141 : vector<1x10xf32> to vector<16x10xf32>
    %152 = arith.addf %150, %151 : vector<16x10xf32>
    %153 = arith.addf %128, %152 : vector<16x10xf32>
    %c0_52 = arith.constant 0 : index
    %c1536 = arith.constant 1536 : index
    %154 = vector.load %arg1[%c0_52, %c1536] : memref<10x1664xf32, #tpu.memory_space<vmem>>, vector<10x10xf32>
    %cst_53 = arith.constant dense<0.000000e+00> : vector<16x10xf32>
    %155 = tpu.matmul %153, %154, %cst_53 {dimension_numbers = #tpu.dot_dimension_numbers<[1], [0], [0], [1], [0, 0, 1, 1], [], []>} : vector<16x10xf32>, vector<10x10xf32>, vector<16x10xf32> -> vector<16x10xf32>
    %c8 = arith.constant 8 : index
    %c0_54 = arith.constant 0 : index
    %156 = vector.load %arg4[%c8, %c0_54] : memref<9x10xf32, #tpu.memory_space<vmem>>, vector<1x10xf32>
    %157 = vector.broadcast %156 : vector<1x10xf32> to vector<16x10xf32>
    %158 = arith.addf %155, %157 : vector<16x10xf32>
    %cst_55 = arith.constant dense<0.000000e+00> : vector<16xf32>
    %159 = vector.multi_reduction <add>, %158, %cst_55 [1] : vector<16x10xf32> to vector<16xf32>
    %160 = vector.shape_cast %159 : vector<16xf32> to vector<16x1xf32>
    %cst_56 = arith.constant 1.000000e+01 : f32
    %161 = vector.broadcast %cst_56 : f32 to vector<16x1xf32>
    %162 = arith.divf %160, %161 : vector<16x1xf32>
    %163 = vector.broadcast %162 : vector<16x1xf32> to vector<16x10xf32>
    %164 = arith.subf %158, %163 : vector<16x10xf32>
    %165 = arith.mulf %164, %164 : vector<16x10xf32>
    %cst_57 = arith.constant dense<0.000000e+00> : vector<16xf32>
    %166 = vector.multi_reduction <add>, %165, %cst_57 [1] : vector<16x10xf32> to vector<16xf32>
    %167 = vector.shape_cast %166 : vector<16xf32> to vector<16x1xf32>
    %cst_58 = arith.constant 1.000000e+01 : f32
    %168 = vector.broadcast %cst_58 : f32 to vector<16x1xf32>
    %169 = arith.divf %167, %168 : vector<16x1xf32>
    %c6 = arith.constant 6 : index
    %c0_59 = arith.constant 0 : index
    %170 = vector.load %arg4[%c6, %c0_59] : memref<9x10xf32, #tpu.memory_space<vmem>>, vector<1x10xf32>
    %c7 = arith.constant 7 : index
    %c0_60 = arith.constant 0 : index
    %171 = vector.load %arg4[%c7, %c0_60] : memref<9x10xf32, #tpu.memory_space<vmem>>, vector<1x10xf32>
    %172 = vector.broadcast %162 : vector<16x1xf32> to vector<16x10xf32>
    %173 = arith.subf %158, %172 : vector<16x10xf32>
    %cst_61 = arith.constant 9.99999974E-6 : f32
    %174 = vector.broadcast %cst_61 : f32 to vector<16x1xf32>
    %175 = arith.addf %169, %174 : vector<16x1xf32>
    %176 = math.rsqrt %175 : vector<16x1xf32>
    %177 = vector.broadcast %176 : vector<16x1xf32> to vector<16x10xf32>
    %178 = arith.mulf %173, %177 : vector<16x10xf32>
    %179 = vector.broadcast %170 : vector<1x10xf32> to vector<16x10xf32>
    %180 = arith.mulf %178, %179 : vector<16x10xf32>
    %181 = vector.broadcast %171 : vector<1x10xf32> to vector<16x10xf32>
    %182 = arith.addf %180, %181 : vector<16x10xf32>
    %183 = arith.addf %158, %182 : vector<16x10xf32>
    %184 = vector.shape_cast %183 : vector<16x10xf32> to vector<2x8x10xf32>
    %c0_62 = arith.constant 0 : index
    %c0_63 = arith.constant 0 : index
    %c0_64 = arith.constant 0 : index
    %185 = vector.load %arg5[%c0_62, %c0_63, %c0_64] : memref<2x8x10xf32, #tpu.memory_space<vmem>>, vector<2x8x10xf32>
    tpu.vector_store %arg5[%c0_62, %c0_63, %c0_64], %184 {strides = array<i32>} : memref<2x8x10xf32, #tpu.memory_space<vmem>>, vector<2x8x10xf32>,
    return
  }
}

</mosaic_0001>

<llo_original>
// kernel: tpu_custom_call.1
$region0: #{tpu_custom_call.1}
  #allocation0 [shape = 'u32[]', space=smem, size = 0x4, offset = 0x4, fixed_abs, tag = 'smem constant byte address 0x4 - core index']
  #allocation1 [shape = 'u32[144,128]{1,0:T(1,128)}', space=vmem, size = 0x12000, scoped, tag = 'internal scratch']
  %s0 = inlined_call_operand.hbm [shape: f32[2,8,10], index: 0, kind: input, shape index: {}, may-alias: {0,5}]
  %s1 = inlined_call_operand.vmem [shape: f32[10,1664], index: 1, kind: input, shape index: {}]
  %s2 = inlined_call_operand.vmem [shape: f32[512,10], index: 2, kind: input, shape index: {}]
  %s3 = inlined_call_operand.vmem [shape: f32[2,768], index: 3, kind: input, shape index: {}]
  %s4 = inlined_call_operand.vmem [shape: f32[9,10], index: 4, kind: input, shape index: {}]
  %s5 = inlined_call_operand.hbm [shape: f32[2,8,10], index: 5, kind: output, shape index: {}, may-alias: {0,5}]
  %s6 = sld [smem:[#allocation0]]
  $region34: #{tpu_custom_call.1} parent=0
    _
  %s8 = ssub.s32 1, %s6
  %s9 = scalar_select 0, %s8, %s6
  $region1: #{tpu_custom_call.1} parent=0
    #allocation2 [shape = 'u8[8192]{0}', space=vmem, size = 0x2000, scoped, tag = 'input window, operand 0, single buffered']
    #allocation3 [shape = 's32[1]{0}', space=sflag, size = 0x4, scoped, tag = 'scoped memory for tpu_custom_call.1']
    #allocation4 [shape = 's32[1]{0}', space=sflag, size = 0x4, scoped, tag = 'scoped memory for tpu_custom_call.1']
    #allocation5 [shape = 'u8[8192]{0}', space=vmem, size = 0x2000, scoped, tag = 'output window, operand 0, single buffered']
    %10 = vsyncpa [#allocation3], 0
    %11 = vsyncpa [#allocation4], 0
    // Predicated region
    $region2: #{tpu_custom_call.1} parent=1 // pred_check
      _
    $region3: #{tpu_custom_call.1} parent=1 // pred_check_branch
      %13 = sbr.rel (0) target = $region5
    $region4: #{tpu_custom_call.1} parent=1 // pred_region
      %s15 = ssub.s32 256, 256
      %16 = vsyncadd [#allocation3], %s15
      %s17 = sshll.u32 [#allocation2], 4
      %s18 = int_to_ptr.vmem [resolvable:$true] %s17
      %23 = dma.hbm_to_vmem [thread:$0]  %s0, 256, %s18, [#allocation3], 128, 128, 8
    $region5: #{tpu_custom_call.1} parent=1 // pred_fallthru
      _
    // Predicated region
    $region6: #{tpu_custom_call.1} parent=1 // pred_check
      _
    $region7: #{tpu_custom_call.1} parent=1 // pred_check_branch
      %25 = sbr.rel (0) target = $region9
    $region8: #{tpu_custom_call.1} parent=1 // pred_region
      _
    $region9: #{tpu_custom_call.1} parent=1 // pred_fallthru
      _
    // Predicated region
    $region10: #{tpu_custom_call.1} parent=1 // pred_check
      _
    $region11: #{tpu_custom_call.1} parent=1 // pred_check_branch
      %27 = sbr.rel (0) target = $region13
    $region12: #{tpu_custom_call.1} parent=1 // pred_region
      _
    $region13: #{tpu_custom_call.1} parent=1 // pred_fallthru
      _
    // Predicated region
    $region14: #{tpu_custom_call.1} parent=1 // pred_check
      _
    $region15: #{tpu_custom_call.1} parent=1 // pred_check_branch
      %29 = sbr.rel (0) target = $region17
    $region16: #{tpu_custom_call.1} parent=1 // pred_region
      _
    $region17: #{tpu_custom_call.1} parent=1 // pred_fallthru
      _
    // Predicated region
    $region18: #{tpu_custom_call.1} parent=1 // pred_check
      _
    $region19: #{tpu_custom_call.1} parent=1 // pred_check_branch
      %31 = sbr.rel (0) target = $region21
    $region20: #{tpu_custom_call.1} parent=1 // pred_region
      _
    $region21: #{tpu_custom_call.1} parent=1 // pred_fallthru
      _
    // Predicated region
    $region22: #{tpu_custom_call.1} parent=1 // pred_check
      _
    $region23: #{tpu_custom_call.1} parent=1 // pred_check_branch
      %33 = sbr.rel (0) target = $region25
    $region24: #{tpu_custom_call.1} parent=1 // pred_region
      %34 = dma.done [#allocation3], 256
    $region25: #{tpu_custom_call.1} parent=1 // pred_fallthru
      _
    %v35 = vld [vmem:[#allocation2] sm:$0xff]
    %v36 = vld [vmem:[#allocation2 + $0x8] sm:$0xff]
    %v37 = vld [vmem:[%s1] sm:$0xff]
    %v38 = vld [vmem:[%s1 + $0x8] sm:$0xff]
    %v39 = vld [vmem:[%s1 + $0x10] sm:$0xff]
    %v40 = vld [vmem:[%s1 + $0x18] sm:$0xff]
    %v41 = vld [vmem:[%s1 + $0x20] sm:$0xff]
    %v42 = vld [vmem:[%s1 + $0x28] sm:$0xff]
    %v43 = vld [vmem:[%s1 + $0x68] sm:$0x3]
    %v44 = vld [vmem:[%s1 + $0x70] sm:$0x3]
    %v45 = vld [vmem:[%s1 + $0x78] sm:$0x3]
    %v46 = vld [vmem:[%s1 + $0x80] sm:$0x3]
    %v47 = vld [vmem:[%s1 + $0x88] sm:$0x3]
    %v48 = vld [vmem:[%s1 + $0x90] sm:$0x3]
    %v49 = vld [vmem:[%s3] ss:$2 sm:$0x3f]
    %v51 = vlaneseq
    %v52 = vshrl.u32 %v51, 7
    %v53 = vsub.s32 0, %v52
    %v54 = vrot.slane %v49, %v53
    %v55 = vlaneseq
    %v56 = vshrl.u32 %v55, 7
    %v57 = vsub.s32 1, %v56
    %v58 = vrot.slane %v49, %v57
    %v59 = vlaneseq
    %v60 = vshrl.u32 %v59, 7
    %v61 = vsub.s32 2, %v60
    %v62 = vrot.slane %v49, %v61
    %v63 = vlaneseq
    %v64 = vshrl.u32 %v63, 7
    %v65 = vsub.s32 3, %v64
    %v66 = vrot.slane %v49, %v65
    %v67 = vlaneseq
    %v68 = vshrl.u32 %v67, 7
    %v69 = vsub.s32 4, %v68
    %v70 = vrot.slane %v49, %v69
    %v71 = vlaneseq
    %v72 = vshrl.u32 %v71, 7
    %v73 = vsub.s32 5, %v72
    %v74 = vrot.slane %v49, %v73
    %vm81 = vcmask 80896
    %v83 = vsel %vm81, %v35, 0
    %v86 = vsel %vm81, %v36, 0
    %vm88 = vcmask 1041408
    %v90 = vsel %vm88, %v43, 0
    %v93 = vsel %vm88, %v44, 0
    %v96 = vsel %vm88, %v45, 0
    %v99 = vsel %vm88, %v46, 0
    %v102 = vsel %vm88, %v47, 0
    %v105 = vsel %vm88, %v48, 0
    %107 = vmatprep.subr.mxu0 %v38
    %108 = vmatpush1.msra.mxu0 %v37
    %109 = vmatprep.subr.mxu0 %v93
    %110 = vmatpush1.msra.mxu0 %v90
    %111 = vmatprep.subr.mxu0 0.0
    %112 = vmatpush1.msra.mxu0 0.0
    %113 = vmatprep.subr.mxu0 0.0
    %114 = vmatpush1.msra.mxu0 0.0
    %115 = vmatprep.subr.mxu0 0.0
    %116 = vmatpush1.msra.mxu0 0.0
    %117 = vmatprep.subr.mxu0 0.0
    %118 = vmatpush1.msra.mxu0 0.0
    %119 = vmatprep.subr.mxu0 0.0
    %120 = vmatpush1.msra.mxu0 0.0
    %121 = vmatprep.subr.mxu0 0.0
    %122 = vmatpush1.msra.mxu0 0.0
    %123 = vmatprep.subr.mxu0 0.0
    %124 = vmatpush1.msra.mxu0 0.0
    %125 = vmatprep.subr.mxu0 0.0
    %126 = vmatpush1.msra.mxu0 0.0
    %127 = vmatprep.subr.mxu0 0.0
    %128 = vmatpush1.msra.mxu0 0.0
    %129 = vmatprep.subr.mxu0 0.0
    %130 = vmatpush1.msra.mxu0 0.0
    %131 = vmatprep.subr.mxu0 0.0
    %132 = vmatpush1.msra.mxu0 0.0
    %133 = vmatprep.subr.mxu0 0.0
    %134 = vmatpush1.msra.mxu0 0.0
    %135 = vmatprep.subr.mxu0 0.0
    %136 = vmatpush1.msra.mxu0 0.0
    %137 = vmatprep.subr.mxu0 0.0
    %138 = vmatpush1.msra.mxu0 0.0
    %139 = vmatprep.subr.mxu0 0.0
    %140 = vmatpush1.msra.mxu0 0.0
    %141 = vmatprep.subr.mxu0 0.0
    %142 = vmatpush1.msra.mxu0 0.0
    %143 = vmatprep.subr.mxu0 0.0
    %144 = vmatpush1.msra.mxu0 0.0
    %145 = vmatprep.subr.mxu0 0.0
    %146 = vmatpush1.msra.mxu0 0.0
    %147 = vmatprep.subr.mxu0 0.0
    %148 = vmatpush1.msra.mxu0 0.0
    %149 = vmatprep.subr.mxu0 0.0
    %150 = vmatpush1.msra.mxu0 0.0
    %151 = vmatprep.subr.mxu0 0.0
    %152 = vmatpush1.msra.mxu0 0.0
    %153 = vmatprep.subr.mxu0 0.0
    %154 = vmatpush1.msra.mxu0 0.0
    %155 = vmatprep.subr.mxu0 0.0
    %156 = vmatpush1.msra.mxu0 0.0
    %157 = vmatprep.subr.mxu0 0.0
    %158 = vmatpush1.msra.mxu0 0.0
    %159 = vmatprep.subr.mxu0 0.0
    %160 = vmatpush1.msra.mxu0 0.0
    %161 = vmatprep.subr.mxu0 0.0
    %162 = vmatpush1.msra.mxu0 0.0
    %163 = vmatprep.subr.mxu0 0.0
    %164 = vmatpush1.msra.mxu0 0.0
    %165 = vmatprep.subr.mxu0 0.0
    %166 = vmatpush1.msra.mxu0 0.0
    %167 = vmatprep.subr.mxu0 0.0
    %168 = vmatpush1.msra.mxu0 0.0
    %169 = vmatprep.subr.mxu0 0.0
    %170 = vmatpush1.msra.mxu0 0.0
    %171 = vmatprep.mubr.f32.mxu0 0.0
    %172 = vmatmul.mubr.f32.gmra.mrb[0].mxu0 %v83
    %v173 = vpop.f32.mrb[0].mxu0
    %v174 = vadd.f32 %v54, %v173
    %v175 = vpop.f32.mrb[0].mxu0
    %v176 = vadd.f32 %v58, %v175
    %177 = vmatprep.mubr.f32.mxu0 0.0
    %178 = vmatmul.mubr.f32.gmra.mrb[0].mxu0 %v86
    %v179 = vpop.f32.mrb[0].mxu0
    %v180 = vadd.f32 %v54, %v179
    %v181 = vpop.f32.mrb[0].mxu0
    %v182 = vadd.f32 %v58, %v181
    %183 = vdwg.mxu0
    %184 = vmatprep.subr.mxu0 %v40
    %185 = vmatpush1.msra.mxu0 %v39
    %186 = vmatprep.subr.mxu0 %v99
    %187 = vmatpush1.msra.mxu0 %v96
    %188 = vmatprep.subr.mxu0 0.0
    %189 = vmatpush1.msra.mxu0 0.0
    %190 = vmatprep.subr.mxu0 0.0
    %191 = vmatpush1.msra.mxu0 0.0
    %192 = vmatprep.subr.mxu0 0.0
    %193 = vmatpush1.msra.mxu0 0.0
    %194 = vmatprep.subr.mxu0 0.0
    %195 = vmatpush1.msra.mxu0 0.0
    %196 = vmatprep.subr.mxu0 0.0
    %197 = vmatpush1.msra.mxu0 0.0
    %198 = vmatprep.subr.mxu0 0.0
    %199 = vmatpush1.msra.mxu0 0.0
    %200 = vmatprep.subr.mxu0 0.0
    %201 = vmatpush1.msra.mxu0 0.0
    %202 = vmatprep.subr.mxu0 0.0
    %203 = vmatpush1.msra.mxu0 0.0
    %204 = vmatprep.subr.mxu0 0.0
    %205 = vmatpush1.msra.mxu0 0.0
    %206 = vmatprep.subr.mxu0 0.0
    %207 = vmatpush1.msra.mxu0 0.0
    %208 = vmatprep.subr.mxu0 0.0
    %209 = vmatpush1.msra.mxu0 0.0
    %210 = vmatprep.subr.mxu0 0.0
    %211 = vmatpush1.msra.mxu0 0.0
    %212 = vmatprep.subr.mxu0 0.0
    %213 = vmatpush1.msra.mxu0 0.0
    %214 = vmatprep.subr.mxu0 0.0
    %215 = vmatpush1.msra.mxu0 0.0
    %216 = vmatprep.subr.mxu0 0.0
    %217 = vmatpush1.msra.mxu0 0.0
    %218 = vmatprep.subr.mxu0 0.0
    %219 = vmatpush1.msra.mxu0 0.0
    %220 = vmatprep.subr.mxu0 0.0
    %221 = vmatpush1.msra.mxu0 0.0
    %222 = vmatprep.subr.mxu0 0.0
    %223 = vmatpush1.msra.mxu0 0.0
    %224 = vmatprep.subr.mxu0 0.0
    %225 = vmatpush1.msra.mxu0 0.0
    %226 = vmatprep.subr.mxu0 0.0
    %227 = vmatpush1.msra.mxu0 0.0
    %228 = vmatprep.subr.mxu0 0.0
    %229 = vmatpush1.msra.mxu0 0.0
    %230 = vmatprep.subr.mxu0 0.0
    %231 = vmatpush1.msra.mxu0 0.0
    %232 = vmatprep.subr.mxu0 0.0
    %233 = vmatpush1.msra.mxu0 0.0
    %234 = vmatprep.subr.mxu0 0.0
    %235 = vmatpush1.msra.mxu0 0.0
    %236 = vmatprep.subr.mxu0 0.0
    %237 = vmatpush1.msra.mxu0 0.0
    %238 = vmatprep.subr.mxu0 0.0
    %239 = vmatpush1.msra.mxu0 0.0
    %240 = vmatprep.subr.mxu0 0.0
    %241 = vmatpush1.msra.mxu0 0.0
    %242 = vmatprep.subr.mxu0 0.0
    %243 = vmatpush1.msra.mxu0 0.0
    %244 = vmatprep.subr.mxu0 0.0
    %245 = vmatpush1.msra.mxu0 0.0
    %246 = vmatprep.subr.mxu0 0.0
    %247 = vmatpush1.msra.mxu0 0.0
    %248 = vmatprep.mubr.f32.mxu0 0.0
    %249 = vmatmul.mubr.f32.gmra.mrb[0].mxu0 %v83
    %v250 = vpop.f32.mrb[0].mxu0
    %v251 = vadd.f32 %v62, %v250
    %v252 = vpop.f32.mrb[0].mxu0
    %v253 = vadd.f32 %v66, %v252
    %254 = vmatprep.mubr.f32.mxu0 0.0
    %255 = vmatmul.mubr.f32.gmra.mrb[0].mxu0 %v86
    %v256 = vpop.f32.mrb[0].mxu0
    %v257 = vadd.f32 %v62, %v256
    %v258 = vpop.f32.mrb[0].mxu0
    %v259 = vadd.f32 %v66, %v258
    %260 = vdwg.mxu0
    %261 = vmatprep.subr.mxu0 %v42
    %262 = vmatpush1.msra.mxu0 %v41
    %263 = vmatprep.subr.mxu0 %v105
    %264 = vmatpush1.msra.mxu0 %v102
    %265 = vmatprep.subr.mxu0 0.0
    %266 = vmatpush1.msra.mxu0 0.0
    %267 = vmatprep.subr.mxu0 0.0
    %268 = vmatpush1.msra.mxu0 0.0
    %269 = vmatprep.subr.mxu0 0.0
    %270 = vmatpush1.msra.mxu0 0.0
    %271 = vmatprep.subr.mxu0 0.0
    %272 = vmatpush1.msra.mxu0 0.0
    %273 = vmatprep.subr.mxu0 0.0
    %274 = vmatpush1.msra.mxu0 0.0
    %275 = vmatprep.subr.mxu0 0.0
    %276 = vmatpush1.msra.mxu0 0.0
    %277 = vmatprep.subr.mxu0 0.0
    %278 = vmatpush1.msra.mxu0 0.0
    %279 = vmatprep.subr.mxu0 0.0
    %280 = vmatpush1.msra.mxu0 0.0
    %281 = vmatprep.subr.mxu0 0.0
    %282 = vmatpush1.msra.mxu0 0.0
    %283 = vmatprep.subr.mxu0 0.0
    %284 = vmatpush1.msra.mxu0 0.0
    %285 = vmatprep.subr.mxu0 0.0
    %286 = vmatpush1.msra.mxu0 0.0
    %287 = vmatprep.subr.mxu0 0.0
    %288 = vmatpush1.msra.mxu0 0.0
    %289 = vmatprep.subr.mxu0 0.0
    %290 = vmatpush1.msra.mxu0 0.0
    %291 = vmatprep.subr.mxu0 0.0
    %292 = vmatpush1.msra.mxu0 0.0
    %293 = vmatprep.subr.mxu0 0.0
    %294 = vmatpush1.msra.mxu0 0.0
    %295 = vmatprep.subr.mxu0 0.0
    %296 = vmatpush1.msra.mxu0 0.0
    %297 = vmatprep.subr.mxu0 0.0
    %298 = vmatpush1.msra.mxu0 0.0
    %299 = vmatprep.subr.mxu0 0.0
    %300 = vmatpush1.msra.mxu0 0.0
    %301 = vmatprep.subr.mxu0 0.0
    %302 = vmatpush1.msra.mxu0 0.0
    %303 = vmatprep.subr.mxu0 0.0
    %304 = vmatpush1.msra.mxu0 0.0
    %305 = vmatprep.subr.mxu0 0.0
    %306 = vmatpush1.msra.mxu0 0.0
    %307 = vmatprep.subr.mxu0 0.0
    %308 = vmatpush1.msra.mxu0 0.0
    %309 = vmatprep.subr.mxu0 0.0
    %310 = vmatpush1.msra.mxu0 0.0
    %311 = vmatprep.subr.mxu0 0.0
    %312 = vmatpush1.msra.mxu0 0.0
    %313 = vmatprep.subr.mxu0 0.0
    %314 = vmatpush1.msra.mxu0 0.0
    %315 = vmatprep.subr.mxu0 0.0
    %316 = vmatpush1.msra.mxu0 0.0
    %317 = vmatprep.subr.mxu0 0.0
    %318 = vmatpush1.msra.mxu0 0.0
    %319 = vmatprep.subr.mxu0 0.0
    %320 = vmatpush1.msra.mxu0 0.0
    %321 = vmatprep.subr.mxu0 0.0
    %322 = vmatpush1.msra.mxu0 0.0
    %323 = vmatprep.subr.mxu0 0.0
    %324 = vmatpush1.msra.mxu0 0.0
    %325 = vmatprep.mubr.f32.mxu0 0.0
    %326 = vmatmul.mubr.f32.gmra.mrb[0].mxu0 %v83
    %v327 = vpop.f32.mrb[0].mxu0
    %v328 = vadd.f32 %v70, %v327
    %v329 = vpop.f32.mrb[0].mxu0
    %v330 = vadd.f32 %v74, %v329
    %331 = vmatprep.mubr.f32.mxu0 0.0
    %332 = vmatmul.mubr.f32.gmra.mrb[0].mxu0 %v86
    %v333 = vpop.f32.mrb[0].mxu0
    %v334 = vadd.f32 %v70, %v333
    %v335 = vpop.f32.mrb[0].mxu0
    %v336 = vadd.f32 %v74, %v335
    %337 = vdwg.mxu0
    %338 = vmatprep.subr.mxu0 0.0
    %339 = vmatpush1.xpose.msra.mxu0 %v176
    %340 = vmatprep.subr.mxu0 0.0
    %341 = vmatpush1.xpose.msra.mxu0 0.0
    %342 = vmatprep.subr.mxu0 0.0
    %343 = vmatpush1.xpose.msra.mxu0 0.0
    %344 = vmatprep.subr.mxu0 0.0
    %345 = vmatpush1.xpose.msra.mxu0 0.0
    %346 = vmatprep.subr.mxu0 0.0
    %347 = vmatpush1.xpose.msra.mxu0 0.0
    %348 = vmatprep.subr.mxu0 0.0
    %349 = vmatpush1.xpose.msra.mxu0 0.0
    %350 = vmatprep.subr.mxu0 0.0
    %351 = vmatpush1.xpose.msra.mxu0 0.0
    %352 = vmatprep.subr.mxu0 0.0
    %353 = vmatpush1.xpose.msra.mxu0 0.0
    %354 = vmatprep.subr.mxu0 0.0
    %355 = vmatpush1.xpose.msra.mxu0 0.0
    %356 = vmatprep.subr.mxu0 0.0
    %357 = vmatpush1.xpose.msra.mxu0 0.0
    %358 = vmatprep.subr.mxu0 0.0
    %359 = vmatpush1.xpose.msra.mxu0 0.0
    %360 = vmatprep.subr.mxu0 0.0
    %361 = vmatpush1.xpose.msra.mxu0 0.0
    %362 = vmatprep.subr.mxu0 0.0
    %363 = vmatpush1.xpose.msra.mxu0 0.0
    %364 = vmatprep.subr.mxu0 0.0
    %365 = vmatpush1.xpose.msra.mxu0 0.0
    %366 = vmatprep.subr.mxu0 0.0
    %367 = vmatpush1.xpose.msra.mxu0 0.0
    %368 = vmatprep.subr.mxu0 0.0
    %369 = vmatpush1.xpose.msra.mxu0 0.0
    %370 = vmatprep.subr.mxu0 0.0
    %371 = vmatpush1.xpose.msra.mxu0 0.0
    %372 = vmatprep.subr.mxu0 0.0
    %373 = vmatpush1.xpose.msra.mxu0 0.0
    %374 = vmatprep.subr.mxu0 0.0
    %375 = vmatpush1.xpose.msra.mxu0 0.0
    %376 = vmatprep.subr.mxu0 0.0
    %377 = vmatpush1.xpose.msra.mxu0 0.0
    %378 = vmatprep.subr.mxu0 0.0
    %379 = vmatpush1.xpose.msra.mxu0 0.0
    %380 = vmatprep.subr.mxu0 0.0
    %381 = vmatpush1.xpose.msra.mxu0 0.0
    %382 = vmatprep.subr.mxu0 0.0
    %383 = vmatpush1.xpose.msra.mxu0 0.0
    %384 = vmatprep.subr.mxu0 0.0
    %385 = vmatpush1.xpose.msra.mxu0 0.0
    %386 = vmatprep.subr.mxu0 0.0
    %387 = vmatpush1.xpose.msra.mxu0 0.0
    %388 = vmatprep.subr.mxu0 0.0
    %389 = vmatpush1.xpose.msra.mxu0 0.0
    %390 = vmatprep.subr.mxu0 0.0
    %391 = vmatpush1.xpose.msra.mxu0 0.0
    %392 = vmatprep.subr.mxu0 0.0
    %393 = vmatpush1.xpose.msra.mxu0 0.0
    %394 = vmatprep.subr.mxu0 0.0
    %395 = vmatpush1.xpose.msra.mxu0 0.0
    %396 = vmatprep.subr.mxu0 0.0
    %397 = vmatpush1.xpose.msra.mxu0 0.0
    %398 = vmatprep.subr.mxu0 0.0
    %399 = vmatpush1.xpose.msra.mxu0 0.0
    %400 = vmatprep.subr.mxu0 0.0
    %401 = vmatpush1.xpose.msra.mxu0 0.0
    %402 = vmatprep.mubr.f32.mxu0 0.0
    %403 = vmatmul.mubr.f32.gmra.mrb[0].mxu0 %v174
    %v404 = vpop.f32.mrb[0].mxu0
    %v405 = vadd.f32 0.0, %v404
    %v406 = vpop.f32.mrb[0].mxu0
    %407 = vdwg.mxu0
    %408 = vmatprep.subr.mxu0 0.0
    %409 = vmatpush1.xpose.msra.mxu0 %v182
    %410 = vmatprep.subr.mxu0 0.0
    %411 = vmatpush1.xpose.msra.mxu0 0.0
    %412 = vmatprep.subr.mxu0 0.0
    %413 = vmatpush1.xpose.msra.mxu0 0.0
    %414 = vmatprep.subr.mxu0 0.0
    %415 = vmatpush1.xpose.msra.mxu0 0.0
    %416 = vmatprep.subr.mxu0 0.0
    %417 = vmatpush1.xpose.msra.mxu0 0.0
    %418 = vmatprep.subr.mxu0 0.0
    %419 = vmatpush1.xpose.msra.mxu0 0.0
    %420 = vmatprep.subr.mxu0 0.0
    %421 = vmatpush1.xpose.msra.mxu0 0.0
    %422 = vmatprep.subr.mxu0 0.0
    %423 = vmatpush1.xpose.msra.mxu0 0.0
    %424 = vmatprep.subr.mxu0 0.0
    %425 = vmatpush1.xpose.msra.mxu0 0.0
    %426 = vmatprep.subr.mxu0 0.0
    %427 = vmatpush1.xpose.msra.mxu0 0.0
    %428 = vmatprep.subr.mxu0 0.0
    %429 = vmatpush1.xpose.msra.mxu0 0.0
    %430 = vmatprep.subr.mxu0 0.0
    %431 = vmatpush1.xpose.msra.mxu0 0.0
    %432 = vmatprep.subr.mxu0 0.0
    %433 = vmatpush1.xpose.msra.mxu0 0.0
    %434 = vmatprep.subr.mxu0 0.0
    %435 = vmatpush1.xpose.msra.mxu0 0.0
    %436 = vmatprep.subr.mxu0 0.0
    %437 = vmatpush1.xpose.msra.mxu0 0.0
    %438 = vmatprep.subr.mxu0 0.0
    %439 = vmatpush1.xpose.msra.mxu0 0.0
    %440 = vmatprep.subr.mxu0 0.0
    %441 = vmatpush1.xpose.msra.mxu0 0.0
    %442 = vmatprep.subr.mxu0 0.0
    %443 = vmatpush1.xpose.msra.mxu0 0.0
    %444 = vmatprep.subr.mxu0 0.0
    %445 = vmatpush1.xpose.msra.mxu0 0.0
    %446 = vmatprep.subr.mxu0 0.0
    %447 = vmatpush1.xpose.msra.mxu0 0.0
    %448 = vmatprep.subr.mxu0 0.0
    %449 = vmatpush1.xpose.msra.mxu0 0.0
    %450 = vmatprep.subr.mxu0 0.0
    %451 = vmatpush1.xpose.msra.mxu0 0.0
    %452 = vmatprep.subr.mxu0 0.0
    %453 = vmatpush1.xpose.msra.mxu0 0.0
    %454 = vmatprep.subr.mxu0 0.0
    %455 = vmatpush1.xpose.msra.mxu0 0.0
    %456 = vmatprep.subr.mxu0 0.0
    %457 = vmatpush1.xpose.msra.mxu0 0.0
    %458 = vmatprep.subr.mxu0 0.0
    %459 = vmatpush1.xpose.msra.mxu0 0.0
    %460 = vmatprep.subr.mxu0 0.0
    %461 = vmatpush1.xpose.msra.mxu0 0.0
    %462 = vmatprep.subr.mxu0 0.0
    %463 = vmatpush1.xpose.msra.mxu0 0.0
    %464 = vmatprep.subr.mxu0 0.0
    %465 = vmatpush1.xpose.msra.mxu0 0.0
    %466 = vmatprep.subr.mxu0 0.0
    %467 = vmatpush1.xpose.msra.mxu0 0.0
    %468 = vmatprep.subr.mxu0 0.0
    %469 = vmatpush1.xpose.msra.mxu0 0.0
    %470 = vmatprep.subr.mxu0 0.0
    %471 = vmatpush1.xpose.msra.mxu0 0.0
    %472 = vmatprep.mubr.f32.mxu0 0.0
    %473 = vmatmul.mubr.f32.gmra.mrb[0].mxu0 %v180
    %v474 = vpop.f32.mrb[0].mxu0
    %v475 = vadd.f32 0.0, %v474
    %v476 = vpop.f32.mrb[0].mxu0
    %477 = vdwg.mxu0
    %v478 = vmul.f32 %v405, 0.4472136
    %v479 = vmul.f32 %v475, 0.4472136
    %vm480 = vcmask 64512
    %v481 = vsel %vm480, %v478, -inf
    %482 = vmax.xlane.f32.xlu0 %v481
    %v483 = vpop.xlane.xlu0 %482
    %v484 = vsel %vm480, %v479, -inf
    %485 = vmax.xlane.f32.xlu0 %v484
    %v486 = vpop.xlane.xlu0 %485
    %v487 = vsub.f32 %v478, %v483
    %v488 = vsub.f32 %v479, %v486
    %v489 = vmul.f32 %v487, 1.442695
    %v490 = vpow.pop %v489
    %v491 = vmul.f32 %v488, 1.442695
    %v492 = vpow.pop %v491
    %v493 = vsel %vm480, %v490, 0.0
    %494 = vadd.xlane.f32.xlu0 %v493
    %v495 = vpop.xlane.xlu0 %494
    %v496 = vsel %vm480, %v492, 0.0
    %497 = vadd.xlane.f32.xlu0 %v496
    %v498 = vpop.xlane.xlu0 %497
    %v499 = vrcp.pop %v495
    %v500 = vmul.f32 %v490, %v499
    %v501 = vrcp.pop %v498
    %v502 = vmul.f32 %v492, %v501
    %v504 = vsel %vm480, %v500, 0
    %506 = vmatprep.subr.mxu0 0.0
    %507 = vmatpush1.msra.mxu0 %v251
    %508 = vmatprep.subr.mxu0 0.0
    %509 = vmatpush1.msra.mxu0 0.0
    %510 = vmatprep.subr.mxu0 0.0
    %511 = vmatpush1.msra.mxu0 0.0
    %512 = vmatprep.subr.mxu0 0.0
    %513 = vmatpush1.msra.mxu0 0.0
    %514 = vmatprep.subr.mxu0 0.0
    %515 = vmatpush1.msra.mxu0 0.0
    %516 = vmatprep.subr.mxu0 0.0
    %517 = vmatpush1.msra.mxu0 0.0
    %518 = vmatprep.subr.mxu0 0.0
    %519 = vmatpush1.msra.mxu0 0.0
    %520 = vmatprep.subr.mxu0 0.0
    %521 = vmatpush1.msra.mxu0 0.0
    %522 = vmatprep.subr.mxu0 0.0
    %523 = vmatpush1.msra.mxu0 0.0
    %524 = vmatprep.subr.mxu0 0.0
    %525 = vmatpush1.msra.mxu0 0.0
    %526 = vmatprep.subr.mxu0 0.0
    %527 = vmatpush1.msra.mxu0 0.0
    %528 = vmatprep.subr.mxu0 0.0
    %529 = vmatpush1.msra.mxu0 0.0
    %530 = vmatprep.subr.mxu0 0.0
    %531 = vmatpush1.msra.mxu0 0.0
    %532 = vmatprep.subr.mxu0 0.0
    %533 = vmatpush1.msra.mxu0 0.0
    %534 = vmatprep.subr.mxu0 0.0
    %535 = vmatpush1.msra.mxu0 0.0
    %536 = vmatprep.subr.mxu0 0.0
    %537 = vmatpush1.msra.mxu0 0.0
    %538 = vmatprep.subr.mxu0 0.0
    %539 = vmatpush1.msra.mxu0 0.0
    %540 = vmatprep.subr.mxu0 0.0
    %541 = vmatpush1.msra.mxu0 0.0
    %542 = vmatprep.subr.mxu0 0.0
    %543 = vmatpush1.msra.mxu0 0.0
    %544 = vmatprep.subr.mxu0 0.0
    %545 = vmatpush1.msra.mxu0 0.0
    %546 = vmatprep.subr.mxu0 0.0
    %547 = vmatpush1.msra.mxu0 0.0
    %548 = vmatprep.subr.mxu0 0.0
    %549 = vmatpush1.msra.mxu0 0.0
    %550 = vmatprep.subr.mxu0 0.0
    %551 = vmatpush1.msra.mxu0 0.0
    %552 = vmatprep.subr.mxu0 0.0
    %553 = vmatpush1.msra.mxu0 0.0
    %554 = vmatprep.subr.mxu0 0.0
    %555 = vmatpush1.msra.mxu0 0.0
    %556 = vmatprep.subr.mxu0 0.0
    %557 = vmatpush1.msra.mxu0 0.0
    %558 = vmatprep.subr.mxu0 0.0
    %559 = vmatpush1.msra.mxu0 0.0
    %560 = vmatprep.subr.mxu0 0.0
    %561 = vmatpush1.msra.mxu0 0.0
    %562 = vmatprep.subr.mxu0 0.0
    %563 = vmatpush1.msra.mxu0 0.0
    %564 = vmatprep.subr.mxu0 0.0
    %565 = vmatpush1.msra.mxu0 0.0
    %566 = vmatprep.subr.mxu0 0.0
    %567 = vmatpush1.msra.mxu0 0.0
    %568 = vmatprep.subr.mxu0 0.0
    %569 = vmatpush1.msra.mxu0 0.0
    %570 = vmatprep.mubr.f32.mxu0 0.0
    %571 = vmatmul.mubr.f32.gmra.mrb[0].mxu0 %v504
    %v572 = vpop.f32.mrb[0].mxu0
    %v573 = vadd.f32 0.0, %v572
    %v574 = vpop.f32.mrb[0].mxu0
    %575 = vdwg.mxu0
    %v577 = vsel %vm480, %v502, 0
    %579 = vmatprep.subr.mxu0 0.0
    %580 = vmatpush1.msra.mxu0 %v257
    %581 = vmatprep.subr.mxu0 0.0
    %582 = vmatpush1.msra.mxu0 0.0
    %583 = vmatprep.subr.mxu0 0.0
    %584 = vmatpush1.msra.mxu0 0.0
    %585 = vmatprep.subr.mxu0 0.0
    %586 = vmatpush1.msra.mxu0 0.0
    %587 = vmatprep.subr.mxu0 0.0
    %588 = vmatpush1.msra.mxu0 0.0
    %589 = vmatprep.subr.mxu0 0.0
    %590 = vmatpush1.msra.mxu0 0.0
    %591 = vmatprep.subr.mxu0 0.0
    %592 = vmatpush1.msra.mxu0 0.0
    %593 = vmatprep.subr.mxu0 0.0
    %594 = vmatpush1.msra.mxu0 0.0
    %595 = vmatprep.subr.mxu0 0.0
    %596 = vmatpush1.msra.mxu0 0.0
    %597 = vmatprep.subr.mxu0 0.0
    %598 = vmatpush1.msra.mxu0 0.0
    %599 = vmatprep.subr.mxu0 0.0
    %600 = vmatpush1.msra.mxu0 0.0
    %601 = vmatprep.subr.mxu0 0.0
    %602 = vmatpush1.msra.mxu0 0.0
    %603 = vmatprep.subr.mxu0 0.0
    %604 = vmatpush1.msra.mxu0 0.0
    %605 = vmatprep.subr.mxu0 0.0
    %606 = vmatpush1.msra.mxu0 0.0
    %607 = vmatprep.subr.mxu0 0.0
    %608 = vmatpush1.msra.mxu0 0.0
    %609 = vmatprep.subr.mxu0 0.0
    %610 = vmatpush1.msra.mxu0 0.0
    %611 = vmatprep.subr.mxu0 0.0
    %612 = vmatpush1.msra.mxu0 0.0
    %613 = vmatprep.subr.mxu0 0.0
    %614 = vmatpush1.msra.mxu0 0.0
    %615 = vmatprep.subr.mxu0 0.0
    %616 = vmatpush1.msra.mxu0 0.0
    %617 = vmatprep.subr.mxu0 0.0
    %618 = vmatpush1.msra.mxu0 0.0
    %619 = vmatprep.subr.mxu0 0.0
    %620 = vmatpush1.msra.mxu0 0.0
    %621 = vmatprep.subr.mxu0 0.0
    %622 = vmatpush1.msra.mxu0 0.0
    %623 = vmatprep.subr.mxu0 0.0
    %624 = vmatpush1.msra.mxu0 0.0
    %625 = vmatprep.subr.mxu0 0.0
    %626 = vmatpush1.msra.mxu0 0.0
    %627 = vmatprep.subr.mxu0 0.0
    %628 = vmatpush1.msra.mxu0 0.0
    %629 = vmatprep.subr.mxu0 0.0
    %630 = vmatpush1.msra.mxu0 0.0
    %631 = vmatprep.subr.mxu0 0.0
    %632 = vmatpush1.msra.mxu0 0.0
    %633 = vmatprep.subr.mxu0 0.0
    %634 = vmatpush1.msra.mxu0 0.0
    %635 = vmatprep.subr.mxu0 0.0
    %636 = vmatpush1.msra.mxu0 0.0
    %637 = vmatprep.subr.mxu0 0.0
    %638 = vmatpush1.msra.mxu0 0.0
    %639 = vmatprep.subr.mxu0 0.0
    %640 = vmatpush1.msra.mxu0 0.0
    %641 = vmatprep.subr.mxu0 0.0
    %642 = vmatpush1.msra.mxu0 0.0
    %643 = vmatprep.mubr.f32.mxu0 0.0
    %644 = vmatmul.mubr.f32.gmra.mrb[0].mxu0 %v577
    %v645 = vpop.f32.mrb[0].mxu0
    %v646 = vadd.f32 0.0, %v645
    %v647 = vpop.f32.mrb[0].mxu0
    %648 = vdwg.mxu0
    %649 = vmatprep.subr.mxu0 0.0
    %650 = vmatpush1.xpose.msra.mxu0 %v328
    %651 = vmatprep.subr.mxu0 0.0
    %652 = vmatpush1.xpose.msra.mxu0 0.0
    %653 = vmatprep.subr.mxu0 0.0
    %654 = vmatpush1.xpose.msra.mxu0 0.0
    %655 = vmatprep.subr.mxu0 0.0
    %656 = vmatpush1.xpose.msra.mxu0 0.0
    %657 = vmatprep.subr.mxu0 0.0
    %658 = vmatpush1.xpose.msra.mxu0 0.0
    %659 = vmatprep.subr.mxu0 0.0
    %660 = vmatpush1.xpose.msra.mxu0 0.0
    %661 = vmatprep.subr.mxu0 0.0
    %662 = vmatpush1.xpose.msra.mxu0 0.0
    %663 = vmatprep.subr.mxu0 0.0
    %664 = vmatpush1.xpose.msra.mxu0 0.0
    %665 = vmatprep.subr.mxu0 0.0
    %666 = vmatpush1.xpose.msra.mxu0 0.0
    %667 = vmatprep.subr.mxu0 0.0
    %668 = vmatpush1.xpose.msra.mxu0 0.0
    %669 = vmatprep.subr.mxu0 0.0
    %670 = vmatpush1.xpose.msra.mxu0 0.0
    %671 = vmatprep.subr.mxu0 0.0
    %672 = vmatpush1.xpose.msra.mxu0 0.0
    %673 = vmatprep.subr.mxu0 0.0
    %674 = vmatpush1.xpose.msra.mxu0 0.0
    %675 = vmatprep.subr.mxu0 0.0
    %676 = vmatpush1.xpose.msra.mxu0 0.0
    %677 = vmatprep.subr.mxu0 0.0
    %678 = vmatpush1.xpose.msra.mxu0 0.0
    %679 = vmatprep.subr.mxu0 0.0
    %680 = vmatpush1.xpose.msra.mxu0 0.0
    %681 = vmatprep.subr.mxu0 0.0
    %682 = vmatpush1.xpose.msra.mxu0 0.0
    %683 = vmatprep.subr.mxu0 0.0
    %684 = vmatpush1.xpose.msra.mxu0 0.0
    %685 = vmatprep.subr.mxu0 0.0
    %686 = vmatpush1.xpose.msra.mxu0 0.0
    %687 = vmatprep.subr.mxu0 0.0
    %688 = vmatpush1.xpose.msra.mxu0 0.0
    %689 = vmatprep.subr.mxu0 0.0
    %690 = vmatpush1.xpose.msra.mxu0 0.0
    %691 = vmatprep.subr.mxu0 0.0
    %692 = vmatpush1.xpose.msra.mxu0 0.0
    %693 = vmatprep.subr.mxu0 0.0
    %694 = vmatpush1.xpose.msra.mxu0 0.0
    %695 = vmatprep.subr.mxu0 0.0
    %696 = vmatpush1.xpose.msra.mxu0 0.0
    %697 = vmatprep.subr.mxu0 0.0
    %698 = vmatpush1.xpose.msra.mxu0 0.0
    %699 = vmatprep.subr.mxu0 0.0
    %700 = vmatpush1.xpose.msra.mxu0 0.0
    %701 = vmatprep.subr.mxu0 0.0
    %702 = vmatpush1.xpose.msra.mxu0 0.0
    %703 = vmatprep.subr.mxu0 0.0
    %704 = vmatpush1.xpose.msra.mxu0 0.0
    %705 = vmatprep.subr.mxu0 0.0
    %706 = vmatpush1.xpose.msra.mxu0 0.0
    %707 = vmatprep.subr.mxu0 0.0
    %708 = vmatpush1.xpose.msra.mxu0 0.0
    %709 = vmatprep.subr.mxu0 0.0
    %710 = vmatpush1.xpose.msra.mxu0 0.0
    %711 = vmatprep.subr.mxu0 0.0
    %712 = vmatpush1.xpose.msra.mxu0 0.0
    %713 = vmatprep.mubr.f32.mxu0 0.0
    %714 = vmatmul.mubr.f32.gmra.mrb[0].mxu0 %v253
    %v715 = vpop.f32.mrb[0].mxu0
    %v716 = vadd.f32 0.0, %v715
    %v717 = vpop.f32.mrb[0].mxu0
    %718 = vdwg.mxu0
    %719 = vmatprep.subr.mxu0 0.0
    %720 = vmatpush1.xpose.msra.mxu0 %v334
    %721 = vmatprep.subr.mxu0 0.0
    %722 = vmatpush1.xpose.msra.mxu0 0.0
    %723 = vmatprep.subr.mxu0 0.0
    %724 = vmatpush1.xpose.msra.mxu0 0.0
    %725 = vmatprep.subr.mxu0 0.0
    %726 = vmatpush1.xpose.msra.mxu0 0.0
    %727 = vmatprep.subr.mxu0 0.0
    %728 = vmatpush1.xpose.msra.mxu0 0.0
    %729 = vmatprep.subr.mxu0 0.0
    %730 = vmatpush1.xpose.msra.mxu0 0.0
    %731 = vmatprep.subr.mxu0 0.0
    %732 = vmatpush1.xpose.msra.mxu0 0.0
    %733 = vmatprep.subr.mxu0 0.0
    %734 = vmatpush1.xpose.msra.mxu0 0.0
    %735 = vmatprep.subr.mxu0 0.0
    %736 = vmatpush1.xpose.msra.mxu0 0.0
    %737 = vmatprep.subr.mxu0 0.0
    %738 = vmatpush1.xpose.msra.mxu0 0.0
    %739 = vmatprep.subr.mxu0 0.0
    %740 = vmatpush1.xpose.msra.mxu0 0.0
    %741 = vmatprep.subr.mxu0 0.0
    %742 = vmatpush1.xpose.msra.mxu0 0.0
    %743 = vmatprep.subr.mxu0 0.0
    %744 = vmatpush1.xpose.msra.mxu0 0.0
    %745 = vmatprep.subr.mxu0 0.0
    %746 = vmatpush1.xpose.msra.mxu0 0.0
    %747 = vmatprep.subr.mxu0 0.0
    %748 = vmatpush1.xpose.msra.mxu0 0.0
    %749 = vmatprep.subr.mxu0 0.0
    %750 = vmatpush1.xpose.msra.mxu0 0.0
    %751 = vmatprep.subr.mxu0 0.0
    %752 = vmatpush1.xpose.msra.mxu0 0.0
    %753 = vmatprep.subr.mxu0 0.0
    %754 = vmatpush1.xpose.msra.mxu0 0.0
    %755 = vmatprep.subr.mxu0 0.0
    %756 = vmatpush1.xpose.msra.mxu0 0.0
    %757 = vmatprep.subr.mxu0 0.0
    %758 = vmatpush1.xpose.msra.mxu0 0.0
    %759 = vmatprep.subr.mxu0 0.0
    %760 = vmatpush1.xpose.msra.mxu0 0.0
    %761 = vmatprep.subr.mxu0 0.0
    %762 = vmatpush1.xpose.msra.mxu0 0.0
    %763 = vmatprep.subr.mxu0 0.0
    %764 = vmatpush1.xpose.msra.mxu0 0.0
    %765 = vmatprep.subr.mxu0 0.0
    %766 = vmatpush1.xpose.msra.mxu0 0.0
    %767 = vmatprep.subr.mxu0 0.0
    %768 = vmatpush1.xpose.msra.mxu0 0.0
    %769 = vmatprep.subr.mxu0 0.0
    %770 = vmatpush1.xpose.msra.mxu0 0.0
    %771 = vmatprep.subr.mxu0 0.0
    %772 = vmatpush1.xpose.msra.mxu0 0.0
    %773 = vmatprep.subr.mxu0 0.0
    %774 = vmatpush1.xpose.msra.mxu0 0.0
    %775 = vmatprep.subr.mxu0 0.0
    %776 = vmatpush1.xpose.msra.mxu0 0.0
    %777 = vmatprep.subr.mxu0 0.0
    %778 = vmatpush1.xpose.msra.mxu0 0.0
    %779 = vmatprep.subr.mxu0 0.0
    %780 = vmatpush1.xpose.msra.mxu0 0.0
    %781 = vmatprep.subr.mxu0 0.0
    %782 = vmatpush1.xpose.msra.mxu0 0.0
    %783 = vmatprep.mubr.f32.mxu0 0.0
    %784 = vmatmul.mubr.f32.gmra.mrb[0].mxu0 %v259
    %v785 = vpop.f32.mrb[0].mxu0
    %v786 = vadd.f32 0.0, %v785
    %v787 = vpop.f32.mrb[0].mxu0
    %788 = vdwg.mxu0
    %v789 = vmul.f32 %v716, 0.4472136
    %v790 = vmul.f32 %v786, 0.4472136
    %v791 = vsel %vm480, %v789, -inf
    %792 = vmax.xlane.f32.xlu0 %v791
    %v793 = vpop.xlane.xlu0 %792
    %v794 = vsel %vm480, %v790, -inf
    %795 = vmax.xlane.f32.xlu0 %v794
    %v796 = vpop.xlane.xlu0 %795
    %v797 = vsub.f32 %v789, %v793
    %v798 = vsub.f32 %v790, %v796
    %v799 = vmul.f32 %v797, 1.442695
    %v800 = vpow.pop %v799
    %v801 = vmul.f32 %v798, 1.442695
    %v802 = vpow.pop %v801
    %v803 = vsel %vm480, %v800, 0.0
    %804 = vadd.xlane.f32.xlu0 %v803
    %v805 = vpop.xlane.xlu0 %804
    %v806 = vsel %vm480, %v802, 0.0
    %807 = vadd.xlane.f32.xlu0 %v806
    %v808 = vpop.xlane.xlu0 %807
    %v809 = vrcp.pop %v805
    %v810 = vmul.f32 %v800, %v809
    %v811 = vrcp.pop %v808
    %v812 = vmul.f32 %v802, %v811
    %v814 = vsel %vm480, %v810, 0
    %816 = vmatprep.subr.mxu0 0.0
    %817 = vmatpush1.msra.mxu0 %v330
    %818 = vmatprep.subr.mxu0 0.0
    %819 = vmatpush1.msra.mxu0 0.0
    %820 = vmatprep.subr.mxu0 0.0
    %821 = vmatpush1.msra.mxu0 0.0
    %822 = vmatprep.subr.mxu0 0.0
    %823 = vmatpush1.msra.mxu0 0.0
    %824 = vmatprep.subr.mxu0 0.0
    %825 = vmatpush1.msra.mxu0 0.0
    %826 = vmatprep.subr.mxu0 0.0
    %827 = vmatpush1.msra.mxu0 0.0
    %828 = vmatprep.subr.mxu0 0.0
    %829 = vmatpush1.msra.mxu0 0.0
    %830 = vmatprep.subr.mxu0 0.0
    %831 = vmatpush1.msra.mxu0 0.0
    %832 = vmatprep.subr.mxu0 0.0
    %833 = vmatpush1.msra.mxu0 0.0
    %834 = vmatprep.subr.mxu0 0.0
    %835 = vmatpush1.msra.mxu0 0.0
    %836 = vmatprep.subr.mxu0 0.0
    %837 = vmatpush1.msra.mxu0 0.0
    %838 = vmatprep.subr.mxu0 0.0
    %839 = vmatpush1.msra.mxu0 0.0
    %840 = vmatprep.subr.mxu0 0.0
    %841 = vmatpush1.msra.mxu0 0.0
    %842 = vmatprep.subr.mxu0 0.0
    %843 = vmatpush1.msra.mxu0 0.0
    %844 = vmatprep.subr.mxu0 0.0
    %845 = vmatpush1.msra.mxu0 0.0
    %846 = vmatprep.subr.mxu0 0.0
    %847 = vmatpush1.msra.mxu0 0.0
    %848 = vmatprep.subr.mxu0 0.0
    %849 = vmatpush1.msra.mxu0 0.0
    %850 = vmatprep.subr.mxu0 0.0
    %851 = vmatpush1.msra.mxu0 0.0
    %852 = vmatprep.subr.mxu0 0.0
    %853 = vmatpush1.msra.mxu0 0.0
    %854 = vmatprep.subr.mxu0 0.0
    %855 = vmatpush1.msra.mxu0 0.0
    %856 = vmatprep.subr.mxu0 0.0
    %857 = vmatpush1.msra.mxu0 0.0
    %858 = vmatprep.subr.mxu0 0.0
    %859 = vmatpush1.msra.mxu0 0.0
    %860 = vmatprep.subr.mxu0 0.0
    %861 = vmatpush1.msra.mxu0 0.0
    %862 = vmatprep.subr.mxu0 0.0
    %863 = vmatpush1.msra.mxu0 0.0
    %864 = vmatprep.subr.mxu0 0.0
    %865 = vmatpush1.msra.mxu0 0.0
    %866 = vmatprep.subr.mxu0 0.0
    %867 = vmatpush1.msra.mxu0 0.0
    %868 = vmatprep.subr.mxu0 0.0
    %869 = vmatpush1.msra.mxu0 0.0
    %870 = vmatprep.subr.mxu0 0.0
    %871 = vmatpush1.msra.mxu0 0.0
    %872 = vmatprep.subr.mxu0 0.0
    %873 = vmatpush1.msra.mxu0 0.0
    %874 = vmatprep.subr.mxu0 0.0
    %875 = vmatpush1.msra.mxu0 0.0
    %876 = vmatprep.subr.mxu0 0.0
    %877 = vmatpush1.msra.mxu0 0.0
    %878 = vmatprep.subr.mxu0 0.0
    %879 = vmatpush1.msra.mxu0 0.0
    %880 = vmatprep.mubr.f32.mxu0 0.0
    %881 = vmatmul.mubr.f32.gmra.mrb[0].mxu0 %v814
    %v882 = vpop.f32.mrb[0].mxu0
    %v883 = vadd.f32 0.0, %v882
    %v884 = vpop.f32.mrb[0].mxu0
    %885 = vdwg.mxu0
    %v887 = vsel %vm480, %v812, 0
    %889 = vmatprep.subr.mxu0 0.0
    %890 = vmatpush1.msra.mxu0 %v336
    %891 = vmatprep.subr.mxu0 0.0
    %892 = vmatpush1.msra.mxu0 0.0
    %893 = vmatprep.subr.mxu0 0.0
    %894 = vmatpush1.msra.mxu0 0.0
    %895 = vmatprep.subr.mxu0 0.0
    %896 = vmatpush1.msra.mxu0 0.0
    %897 = vmatprep.subr.mxu0 0.0
    %898 = vmatpush1.msra.mxu0 0.0
    %899 = vmatprep.subr.mxu0 0.0
    %900 = vmatpush1.msra.mxu0 0.0
    %901 = vmatprep.subr.mxu0 0.0
    %902 = vmatpush1.msra.mxu0 0.0
    %903 = vmatprep.subr.mxu0 0.0
    %904 = vmatpush1.msra.mxu0 0.0
    %905 = vmatprep.subr.mxu0 0.0
    %906 = vmatpush1.msra.mxu0 0.0
    %907 = vmatprep.subr.mxu0 0.0
    %908 = vmatpush1.msra.mxu0 0.0
    %909 = vmatprep.subr.mxu0 0.0
    %910 = vmatpush1.msra.mxu0 0.0
    %911 = vmatprep.subr.mxu0 0.0
    %912 = vmatpush1.msra.mxu0 0.0
    %913 = vmatprep.subr.mxu0 0.0
    %914 = vmatpush1.msra.mxu0 0.0
    %915 = vmatprep.subr.mxu0 0.0
    %916 = vmatpush1.msra.mxu0 0.0
    %917 = vmatprep.subr.mxu0 0.0
    %918 = vmatpush1.msra.mxu0 0.0
    %919 = vmatprep.subr.mxu0 0.0
    %920 = vmatpush1.msra.mxu0 0.0
    %921 = vmatprep.subr.mxu0 0.0
    %922 = vmatpush1.msra.mxu0 0.0
    %923 = vmatprep.subr.mxu0 0.0
    %924 = vmatpush1.msra.mxu0 0.0
    %925 = vmatprep.subr.mxu0 0.0
    %926 = vmatpush1.msra.mxu0 0.0
    %927 = vmatprep.subr.mxu0 0.0
    %928 = vmatpush1.msra.mxu0 0.0
    %929 = vmatprep.subr.mxu0 0.0
    %930 = vmatpush1.msra.mxu0 0.0
    %931 = vmatprep.subr.mxu0 0.0
    %932 = vmatpush1.msra.mxu0 0.0
    %933 = vmatprep.subr.mxu0 0.0
    %934 = vmatpush1.msra.mxu0 0.0
    %935 = vmatprep.subr.mxu0 0.0
    %936 = vmatpush1.msra.mxu0 0.0
    %937 = vmatprep.subr.mxu0 0.0
    %938 = vmatpush1.msra.mxu0 0.0
    %939 = vmatprep.subr.mxu0 0.0
    %940 = vmatpush1.msra.mxu0 0.0
    %941 = vmatprep.subr.mxu0 0.0
    %942 = vmatpush1.msra.mxu0 0.0
    %943 = vmatprep.subr.mxu0 0.0
    %944 = vmatpush1.msra.mxu0 0.0
    %945 = vmatprep.subr.mxu0 0.0
    %946 = vmatpush1.msra.mxu0 0.0
    %947 = vmatprep.subr.mxu0 0.0
    %948 = vmatpush1.msra.mxu0 0.0
    %949 = vmatprep.subr.mxu0 0.0
    %950 = vmatpush1.msra.mxu0 0.0
    %951 = vmatprep.subr.mxu0 0.0
    %952 = vmatpush1.msra.mxu0 0.0
    %953 = vmatprep.mubr.f32.mxu0 0.0
    %954 = vmatmul.mubr.f32.gmra.mrb[0].mxu0 %v887
    %v955 = vpop.f32.mrb[0].mxu0
    %v956 = vadd.f32 0.0, %v955
    %v957 = vpop.f32.mrb[0].mxu0
    %958 = vdwg.mxu0
    %v959 = vld [vmem:[%s2] sm:$0xff]
    %v960 = vld [vmem:[%s2 + $0x8] sm:$0xff]
    %v961 = vld [vmem:[%s2 + $0x10] sm:$0xff]
    %v962 = vld [vmem:[%s2 + $0x18] sm:$0xff]
    %v963 = vld [vmem:[%s2 + $0x20] sm:$0xff]
    %v964 = vld [vmem:[%s2 + $0x28] sm:$0xff]
    %v965 = vld [vmem:[%s2 + $0x30] sm:$0xff]
    %v966 = vld [vmem:[%s2 + $0x38] sm:$0xff]
    %v967 = vld [vmem:[%s2 + $0x40] sm:$0xff]
    %v968 = vld [vmem:[%s2 + $0x48] sm:$0xff]
    %v969 = vld [vmem:[%s2 + $0x50] sm:$0xff]
    %v970 = vld [vmem:[%s2 + $0x58] sm:$0xff]
    %v971 = vld [vmem:[%s2 + $0x60] sm:$0xff]
    %v972 = vld [vmem:[%s2 + $0x68] sm:$0xff]
    %v973 = vld [vmem:[%s2 + $0x70] sm:$0xff]
    %v974 = vld [vmem:[%s2 + $0x78] sm:$0xff]
    %v975 = vld [vmem:[%s2 + $0x80] sm:$0xff]
    %v976 = vld [vmem:[%s2 + $0x88] sm:$0xff]
    %v977 = vld [vmem:[%s2 + $0x90] sm:$0xff]
    %v978 = vld [vmem:[%s2 + $0x98] sm:$0xff]
    %v979 = vld [vmem:[%s2 + $0xa0] sm:$0xff]
    %v980 = vld [vmem:[%s2 + $0xa8] sm:$0xff]
    %v981 = vld [vmem:[%s2 + $0xb0] sm:$0xff]
    %v982 = vld [vmem:[%s2 + $0xb8] sm:$0xff]
    %v983 = vld [vmem:[%s2 + $0xc0] sm:$0xff]
    %v984 = vld [vmem:[%s2 + $0xc8] sm:$0xff]
    %v985 = vld [vmem:[%s2 + $0xd0] sm:$0xff]
    %v986 = vld [vmem:[%s2 + $0xd8] sm:$0xff]
    %v987 = vld [vmem:[%s2 + $0xe0] sm:$0xff]
    %v988 = vld [vmem:[%s2 + $0xe8] sm:$0xff]
    %v989 = vld [vmem:[%s2 + $0xf0] sm:$0xff]
    %v990 = vld [vmem:[%s2 + $0xf8] sm:$0xff]
    %v991 = vld [vmem:[%s4] sm:$0x1]
    %v992 = vlaneseq
    %v993 = vshrl.u32 %v992, 7
    %v994 = vsub.s32 0, %v993
    %v995 = vrot.slane %v991, %v994
    %996 = vmatprep.subr.mxu0 0.0
    %997 = vmatpush1.msra.mxu0 %v959
    %998 = vmatprep.subr.mxu0 0.0
    %999 = vmatpush1.msra.mxu0 %v960
    %1000 = vmatprep.subr.mxu0 0.0
    %1001 = vmatpush1.msra.mxu0 %v961
    %1002 = vmatprep.subr.mxu0 0.0
    %1003 = vmatpush1.msra.mxu0 %v962
    %1004 = vmatprep.subr.mxu0 0.0
    %1005 = vmatpush1.msra.mxu0 %v963
    %1006 = vmatprep.subr.mxu0 0.0
    %1007 = vmatpush1.msra.mxu0 %v964
    %1008 = vmatprep.subr.mxu0 0.0
    %1009 = vmatpush1.msra.mxu0 %v965
    %1010 = vmatprep.subr.mxu0 0.0
    %1011 = vmatpush1.msra.mxu0 %v966
    %1012 = vmatprep.subr.mxu0 0.0
    %1013 = vmatpush1.msra.mxu0 %v967
    %1014 = vmatprep.subr.mxu0 0.0
    %1015 = vmatpush1.msra.mxu0 %v968
    %1016 = vmatprep.subr.mxu0 0.0
    %1017 = vmatpush1.msra.mxu0 %v969
    %1018 = vmatprep.subr.mxu0 0.0
    %1019 = vmatpush1.msra.mxu0 %v970
    %1020 = vmatprep.subr.mxu0 0.0
    %1021 = vmatpush1.msra.mxu0 %v971
    %1022 = vmatprep.subr.mxu0 0.0
    %1023 = vmatpush1.msra.mxu0 %v972
    %1024 = vmatprep.subr.mxu0 0.0
    %1025 = vmatpush1.msra.mxu0 %v973
    %1026 = vmatprep.subr.mxu0 0.0
    %1027 = vmatpush1.msra.mxu0 %v974
    %1028 = vmatprep.subr.mxu0 0.0
    %1029 = vmatpush1.msra.mxu0 %v975
    %1030 = vmatprep.subr.mxu0 0.0
    %1031 = vmatpush1.msra.mxu0 %v976
    %1032 = vmatprep.subr.mxu0 0.0
    %1033 = vmatpush1.msra.mxu0 %v977
    %1034 = vmatprep.subr.mxu0 0.0
    %1035 = vmatpush1.msra.mxu0 %v978
    %1036 = vmatprep.subr.mxu0 0.0
    %1037 = vmatpush1.msra.mxu0 %v979
    %1038 = vmatprep.subr.mxu0 0.0
    %1039 = vmatpush1.msra.mxu0 %v980
    %1040 = vmatprep.subr.mxu0 0.0
    %1041 = vmatpush1.msra.mxu0 %v981
    %1042 = vmatprep.subr.mxu0 0.0
    %1043 = vmatpush1.msra.mxu0 %v982
    %1044 = vmatprep.subr.mxu0 0.0
    %1045 = vmatpush1.msra.mxu0 %v983
    %1046 = vmatprep.subr.mxu0 0.0
    %1047 = vmatpush1.msra.mxu0 %v984
    %1048 = vmatprep.subr.mxu0 0.0
    %1049 = vmatpush1.msra.mxu0 %v985
    %1050 = vmatprep.subr.mxu0 0.0
    %1051 = vmatpush1.msra.mxu0 %v986
    %1052 = vmatprep.subr.mxu0 0.0
    %1053 = vmatpush1.msra.mxu0 %v987
    %1054 = vmatprep.subr.mxu0 0.0
    %1055 = vmatpush1.msra.mxu0 %v988
    %1056 = vmatprep.subr.mxu0 0.0
    %1057 = vmatpush1.msra.mxu0 %v989
    %1058 = vmatprep.subr.mxu0 0.0
    %1059 = vmatpush1.msra.mxu0 %v990
    %1060 = vmatprep.mubr.f32.mxu0 %v883
    %1061 = vmatmul.mubr.f32.gmra.mrb[0].mxu0 %v573
    %v1062 = vpop.f32.mrb[0].mxu0
    %v1063 = vadd.f32 %v995, %v1062
    %v1064 = vpop.f32.mrb[0].mxu0
    %1065 = vmatprep.mubr.f32.mxu0 %v956
    %1066 = vmatmul.mubr.f32.gmra.mrb[0].mxu0 %v646
    %v1067 = vpop.f32.mrb[0].mxu0
    %v1068 = vadd.f32 %v995, %v1067
    %v1069 = vpop.f32.mrb[0].mxu0
    %1070 = vdwg.mxu0
    %v1071 = vsel %vm81, %v1063, 0.0
    %1072 = vadd.xlane.f32.xlu0 %v1071
    %v1073 = vpop.xlane.xlu0 %1072
    %v1074 = vsel %vm81, %v1068, 0.0
    %1075 = vadd.xlane.f32.xlu0 %v1074
    %v1076 = vpop.xlane.xlu0 %1075
    %v1077 = vrcp.pop 10.0
    %v1078 = vmul.f32 %v1073, %v1077
    %v1079 = vmul.f32 %v1076, %v1077
    %v1080 = vsub.f32 %v1063, %v1078
    %v1081 = vsub.f32 %v1068, %v1079
    %v1082 = vmul.f32 %v1080, %v1080
    %v1083 = vmul.f32 %v1081, %v1081
    %v1084 = vsel %vm81, %v1082, 0.0
    %1085 = vadd.xlane.f32.xlu0 %v1084
    %v1086 = vpop.xlane.xlu0 %1085
    %v1087 = vsel %vm81, %v1083, 0.0
    %1088 = vadd.xlane.f32.xlu0 %v1087
    %v1089 = vpop.xlane.xlu0 %1088
    %v1090 = vmul.f32 %v1086, %v1077
    %v1091 = vmul.f32 %v1089, %v1077
    %v1092 = vld [vmem:[%s4 + $0x2] sm:$0x1]
    %v1093 = vld [vmem:[%s4 + $0x3] sm:$0x1]
    %v1094 = vadd.f32 %v1090, 1e-05
    %v1095 = vadd.f32 %v1091, 1e-05
    %v1096 = vrsqrt.pop %v1094
    %v1097 = vrsqrt.pop %v1095
    %v1098 = vmul.f32 %v1080, %v1096
    %v1099 = vmul.f32 %v1081, %v1097
    %v1100 = vlaneseq
    %v1101 = vshrl.u32 %v1100, 7
    %v1102 = vsub.s32 0, %v1101
    %v1103 = vrot.slane %v1092, %v1102
    %v1104 = vmul.f32 %v1098, %v1103
    %v1105 = vmul.f32 %v1099, %v1103
    %v1106 = vlaneseq
    %v1107 = vshrl.u32 %v1106, 7
    %v1108 = vsub.s32 0, %v1107
    %v1109 = vrot.slane %v1093, %v1108
    %v1110 = vadd.f32 %v1104, %v1109
    %v1111 = vadd.f32 %v1105, %v1109
    %v1112 = vadd.f32 %v35, %v1110
    %v1113 = vadd.f32 %v36, %v1111
    %v1114 = vld [vmem:[%s1 + $0x30] sm:$0xff]
    %v1115 = vld [vmem:[%s1 + $0x38] sm:$0xff]
    %v1116 = vld [vmem:[%s1 + $0x40] sm:$0xff]
    %v1117 = vld [vmem:[%s1 + $0x48] sm:$0xff]
    %v1118 = vld [vmem:[%s1 + $0x50] sm:$0xff]
    %v1119 = vld [vmem:[%s1 + $0x58] sm:$0xff]
    %v1120 = vld [vmem:[%s1 + $0x98] sm:$0x3]
    %v1121 = vld [vmem:[%s1 + $0xa0] sm:$0x3]
    %v1122 = vld [vmem:[%s1 + $0xa8] sm:$0x3]
    %v1123 = vld [vmem:[%s1 + $0xb0] sm:$0x3]
    %v1124 = vld [vmem:[%s1 + $0xb8] sm:$0x3]
    %v1125 = vld [vmem:[%s1 + $0xc0] sm:$0x3]
    %s1126 = scalar_lea.vmem %s3, 1
    %v1127 = vld [vmem:[%s1126] ss:$2 sm:$0x3f]
    %v1129 = vlaneseq
    %v1130 = vshrl.u32 %v1129, 7
    %v1131 = vsub.s32 0, %v1130
    %v1132 = vrot.slane %v1127, %v1131
    %v1133 = vlaneseq
    %v1134 = vshrl.u32 %v1133, 7
    %v1135 = vsub.s32 1, %v1134
    %v1136 = vrot.slane %v1127, %v1135
    %v1137 = vlaneseq
    %v1138 = vshrl.u32 %v1137, 7
    %v1139 = vsub.s32 2, %v1138
    %v1140 = vrot.slane %v1127, %v1139
    %v1141 = vlaneseq
    %v1142 = vshrl.u32 %v1141, 7
    %v1143 = vsub.s32 3, %v1142
    %v1144 = vrot.slane %v1127, %v1143
    %v1145 = vlaneseq
    %v1146 = vshrl.u32 %v1145, 7
    %v1147 = vsub.s32 4, %v1146
    %v1148 = vrot.slane %v1127, %v1147
    %v1149 = vlaneseq
    %v1150 = vshrl.u32 %v1149, 7
    %v1151 = vsub.s32 5, %v1150
    %v1152 = vrot.slane %v1127, %v1151
    %v1160 = vsel %vm81, %v1112, 0
    %v1163 = vsel %vm81, %v1113, 0
    %v1166 = vsel %vm88, %v1120, 0
    %v1169 = vsel %vm88, %v1121, 0
    %v1172 = vsel %vm88, %v1122, 0
    %v1175 = vsel %vm88, %v1123, 0
    %v1178 = vsel %vm88, %v1124, 0
    %v1181 = vsel %vm88, %v1125, 0
    %1183 = vmatprep.subr.mxu0 %v1115
    %1184 = vmatpush1.msra.mxu0 %v1114
    %1185 = vmatprep.subr.mxu0 %v1169
    %1186 = vmatpush1.msra.mxu0 %v1166
    %1187 = vmatprep.subr.mxu0 0.0
    %1188 = vmatpush1.msra.mxu0 0.0
    %1189 = vmatprep.subr.mxu0 0.0
    %1190 = vmatpush1.msra.mxu0 0.0
    %1191 = vmatprep.subr.mxu0 0.0
    %1192 = vmatpush1.msra.mxu0 0.0
    %1193 = vmatprep.subr.mxu0 0.0
    %1194 = vmatpush1.msra.mxu0 0.0
    %1195 = vmatprep.subr.mxu0 0.0
    %1196 = vmatpush1.msra.mxu0 0.0
    %1197 = vmatprep.subr.mxu0 0.0
    %1198 = vmatpush1.msra.mxu0 0.0
    %1199 = vmatprep.subr.mxu0 0.0
    %1200 = vmatpush1.msra.mxu0 0.0
    %1201 = vmatprep.subr.mxu0 0.0
    %1202 = vmatpush1.msra.mxu0 0.0
    %1203 = vmatprep.subr.mxu0 0.0
    %1204 = vmatpush1.msra.mxu0 0.0
    %1205 = vmatprep.subr.mxu0 0.0
    %1206 = vmatpush1.msra.mxu0 0.0
    %1207 = vmatprep.subr.mxu0 0.0
    %1208 = vmatpush1.msra.mxu0 0.0
    %1209 = vmatprep.subr.mxu0 0.0
    %1210 = vmatpush1.msra.mxu0 0.0
    %1211 = vmatprep.subr.mxu0 0.0
    %1212 = vmatpush1.msra.mxu0 0.0
    %1213 = vmatprep.subr.mxu0 0.0
    %1214 = vmatpush1.msra.mxu0 0.0
    %1215 = vmatprep.subr.mxu0 0.0
    %1216 = vmatpush1.msra.mxu0 0.0
    %1217 = vmatprep.subr.mxu0 0.0
    %1218 = vmatpush1.msra.mxu0 0.0
    %1219 = vmatprep.subr.mxu0 0.0
    %1220 = vmatpush1.msra.mxu0 0.0
    %1221 = vmatprep.subr.mxu0 0.0
    %1222 = vmatpush1.msra.mxu0 0.0
    %1223 = vmatprep.subr.mxu0 0.0
    %1224 = vmatpush1.msra.mxu0 0.0
    %1225 = vmatprep.subr.mxu0 0.0
    %1226 = vmatpush1.msra.mxu0 0.0
    %1227 = vmatprep.subr.mxu0 0.0
    %1228 = vmatpush1.msra.mxu0 0.0
    %1229 = vmatprep.subr.mxu0 0.0
    %1230 = vmatpush1.msra.mxu0 0.0
    %1231 = vmatprep.subr.mxu0 0.0
    %1232 = vmatpush1.msra.mxu0 0.0
    %1233 = vmatprep.subr.mxu0 0.0
    %1234 = vmatpush1.msra.mxu0 0.0
    %1235 = vmatprep.subr.mxu0 0.0
    %1236 = vmatpush1.msra.mxu0 0.0
    %1237 = vmatprep.subr.mxu0 0.0
    %1238 = vmatpush1.msra.mxu0 0.0
    %1239 = vmatprep.subr.mxu0 0.0
    %1240 = vmatpush1.msra.mxu0 0.0
    %1241 = vmatprep.subr.mxu0 0.0
    %1242 = vmatpush1.msra.mxu0 0.0
    %1243 = vmatprep.subr.mxu0 0.0
    %1244 = vmatpush1.msra.mxu0 0.0
    %1245 = vmatprep.subr.mxu0 0.0
    %1246 = vmatpush1.msra.mxu0 0.0
    %1247 = vmatprep.mubr.f32.mxu0 0.0
    %1248 = vmatmul.mubr.f32.gmra.mrb[0].mxu0 %v1160
    %v1249 = vpop.f32.mrb[0].mxu0
    %v1250 = vadd.f32 %v1132, %v1249
    %v1251 = vpop.f32.mrb[0].mxu0
    %v1252 = vadd.f32 %v1136, %v1251
    %1253 = vmatprep.mubr.f32.mxu0 0.0
    %1254 = vmatmul.mubr.f32.gmra.mrb[0].mxu0 %v1163
    %v1255 = vpop.f32.mrb[0].mxu0
    %v1256 = vadd.f32 %v1132, %v1255
    %v1257 = vpop.f32.mrb[0].mxu0
    %v1258 = vadd.f32 %v1136, %v1257
    %1259 = vdwg.mxu0
    %1260 = vmatprep.subr.mxu0 %v1117
    %1261 = vmatpush1.msra.mxu0 %v1116
    %1262 = vmatprep.subr.mxu0 %v1175
    %1263 = vmatpush1.msra.mxu0 %v1172
    %1264 = vmatprep.subr.mxu0 0.0
    %1265 = vmatpush1.msra.mxu0 0.0
    %1266 = vmatprep.subr.mxu0 0.0
    %1267 = vmatpush1.msra.mxu0 0.0
    %1268 = vmatprep.subr.mxu0 0.0
    %1269 = vmatpush1.msra.mxu0 0.0
    %1270 = vmatprep.subr.mxu0 0.0
    %1271 = vmatpush1.msra.mxu0 0.0
    %1272 = vmatprep.subr.mxu0 0.0
    %1273 = vmatpush1.msra.mxu0 0.0
    %1274 = vmatprep.subr.mxu0 0.0
    %1275 = vmatpush1.msra.mxu0 0.0
    %1276 = vmatprep.subr.mxu0 0.0
    %1277 = vmatpush1.msra.mxu0 0.0
    %1278 = vmatprep.subr.mxu0 0.0
    %1279 = vmatpush1.msra.mxu0 0.0
    %1280 = vmatprep.subr.mxu0 0.0
    %1281 = vmatpush1.msra.mxu0 0.0
    %1282 = vmatprep.subr.mxu0 0.0
    %1283 = vmatpush1.msra.mxu0 0.0
    %1284 = vmatprep.subr.mxu0 0.0
    %1285 = vmatpush1.msra.mxu0 0.0
    %1286 = vmatprep.subr.mxu0 0.0
    %1287 = vmatpush1.msra.mxu0 0.0
    %1288 = vmatprep.subr.mxu0 0.0
    %1289 = vmatpush1.msra.mxu0 0.0
    %1290 = vmatprep.subr.mxu0 0.0
    %1291 = vmatpush1.msra.mxu0 0.0
    %1292 = vmatprep.subr.mxu0 0.0
    %1293 = vmatpush1.msra.mxu0 0.0
    %1294 = vmatprep.subr.mxu0 0.0
    %1295 = vmatpush1.msra.mxu0 0.0
    %1296 = vmatprep.subr.mxu0 0.0
    %1297 = vmatpush1.msra.mxu0 0.0
    %1298 = vmatprep.subr.mxu0 0.0
    %1299 = vmatpush1.msra.mxu0 0.0
    %1300 = vmatprep.subr.mxu0 0.0
    %1301 = vmatpush1.msra.mxu0 0.0
    %1302 = vmatprep.subr.mxu0 0.0
    %1303 = vmatpush1.msra.mxu0 0.0
    %1304 = vmatprep.subr.mxu0 0.0
    %1305 = vmatpush1.msra.mxu0 0.0
    %1306 = vmatprep.subr.mxu0 0.0
    %1307 = vmatpush1.msra.mxu0 0.0
    %1308 = vmatprep.subr.mxu0 0.0
    %1309 = vmatpush1.msra.mxu0 0.0
    %1310 = vmatprep.subr.mxu0 0.0
    %1311 = vmatpush1.msra.mxu0 0.0
    %1312 = vmatprep.subr.mxu0 0.0
    %1313 = vmatpush1.msra.mxu0 0.0
    %1314 = vmatprep.subr.mxu0 0.0
    %1315 = vmatpush1.msra.mxu0 0.0
    %1316 = vmatprep.subr.mxu0 0.0
    %1317 = vmatpush1.msra.mxu0 0.0
    %1318 = vmatprep.subr.mxu0 0.0
    %1319 = vmatpush1.msra.mxu0 0.0
    %1320 = vmatprep.subr.mxu0 0.0
    %1321 = vmatpush1.msra.mxu0 0.0
    %1322 = vmatprep.subr.mxu0 0.0
    %1323 = vmatpush1.msra.mxu0 0.0
    %1324 = vmatprep.mubr.f32.mxu0 0.0
    %1325 = vmatmul.mubr.f32.gmra.mrb[0].mxu0 %v1160
    %v1326 = vpop.f32.mrb[0].mxu0
    %v1327 = vadd.f32 %v1140, %v1326
    %v1328 = vpop.f32.mrb[0].mxu0
    %v1329 = vadd.f32 %v1144, %v1328
    %1330 = vmatprep.mubr.f32.mxu0 0.0
    %1331 = vmatmul.mubr.f32.gmra.mrb[0].mxu0 %v1163
    %v1332 = vpop.f32.mrb[0].mxu0
    %v1333 = vadd.f32 %v1140, %v1332
    %v1334 = vpop.f32.mrb[0].mxu0
    %v1335 = vadd.f32 %v1144, %v1334
    %1336 = vdwg.mxu0
    %1337 = vmatprep.subr.mxu0 %v1119
    %1338 = vmatpush1.msra.mxu0 %v1118
    %1339 = vmatprep.subr.mxu0 %v1181
    %1340 = vmatpush1.msra.mxu0 %v1178
    %1341 = vmatprep.subr.mxu0 0.0
    %1342 = vmatpush1.msra.mxu0 0.0
    %1343 = vmatprep.subr.mxu0 0.0
    %1344 = vmatpush1.msra.mxu0 0.0
    %1345 = vmatprep.subr.mxu0 0.0
    %1346 = vmatpush1.msra.mxu0 0.0
    %1347 = vmatprep.subr.mxu0 0.0
    %1348 = vmatpush1.msra.mxu0 0.0
    %1349 = vmatprep.subr.mxu0 0.0
    %1350 = vmatpush1.msra.mxu0 0.0
    %1351 = vmatprep.subr.mxu0 0.0
    %1352 = vmatpush1.msra.mxu0 0.0
    %1353 = vmatprep.subr.mxu0 0.0
    %1354 = vmatpush1.msra.mxu0 0.0
    %1355 = vmatprep.subr.mxu0 0.0
    %1356 = vmatpush1.msra.mxu0 0.0
    %1357 = vmatprep.subr.mxu0 0.0
    %1358 = vmatpush1.msra.mxu0 0.0
    %1359 = vmatprep.subr.mxu0 0.0
    %1360 = vmatpush1.msra.mxu0 0.0
    %1361 = vmatprep.subr.mxu0 0.0
    %1362 = vmatpush1.msra.mxu0 0.0
    %1363 = vmatprep.subr.mxu0 0.0
    %1364 = vmatpush1.msra.mxu0 0.0
    %1365 = vmatprep.subr.mxu0 0.0
    %1366 = vmatpush1.msra.mxu0 0.0
    %1367 = vmatprep.subr.mxu0 0.0
    %1368 = vmatpush1.msra.mxu0 0.0
    %1369 = vmatprep.subr.mxu0 0.0
    %1370 = vmatpush1.msra.mxu0 0.0
    %1371 = vmatprep.subr.mxu0 0.0
    %1372 = vmatpush1.msra.mxu0 0.0
    %1373 = vmatprep.subr.mxu0 0.0
    %1374 = vmatpush1.msra.mxu0 0.0
    %1375 = vmatprep.subr.mxu0 0.0
    %1376 = vmatpush1.msra.mxu0 0.0
    %1377 = vmatprep.subr.mxu0 0.0
    %1378 = vmatpush1.msra.mxu0 0.0
    %1379 = vmatprep.subr.mxu0 0.0
    %1380 = vmatpush1.msra.mxu0 0.0
    %1381 = vmatprep.subr.mxu0 0.0
    %1382 = vmatpush1.msra.mxu0 0.0
    %1383 = vmatprep.subr.mxu0 0.0
    %1384 = vmatpush1.msra.mxu0 0.0
    %1385 = vmatprep.subr.mxu0 0.0
    %1386 = vmatpush1.msra.mxu0 0.0
    %1387 = vmatprep.subr.mxu0 0.0
    %1388 = vmatpush1.msra.mxu0 0.0
    %1389 = vmatprep.subr.mxu0 0.0
    %1390 = vmatpush1.msra.mxu0 0.0
    %1391 = vmatprep.subr.mxu0 0.0
    %1392 = vmatpush1.msra.mxu0 0.0
    %1393 = vmatprep.subr.mxu0 0.0
    %1394 = vmatpush1.msra.mxu0 0.0
    %1395 = vmatprep.subr.mxu0 0.0
    %1396 = vmatpush1.msra.mxu0 0.0
    %1397 = vmatprep.subr.mxu0 0.0
    %1398 = vmatpush1.msra.mxu0 0.0
    %1399 = vmatprep.subr.mxu0 0.0
    %1400 = vmatpush1.msra.mxu0 0.0
    %1401 = vmatprep.mubr.f32.mxu0 0.0
    %1402 = vmatmul.mubr.f32.gmra.mrb[0].mxu0 %v1160
    %v1403 = vpop.f32.mrb[0].mxu0
    %v1404 = vadd.f32 %v1148, %v1403
    %v1405 = vpop.f32.mrb[0].mxu0
    %v1406 = vadd.f32 %v1152, %v1405
    %1407 = vmatprep.mubr.f32.mxu0 0.0
    %1408 = vmatmul.mubr.f32.gmra.mrb[0].mxu0 %v1163
    %v1409 = vpop.f32.mrb[0].mxu0
    %v1410 = vadd.f32 %v1148, %v1409
    %v1411 = vpop.f32.mrb[0].mxu0
    %v1412 = vadd.f32 %v1152, %v1411
    %1413 = vdwg.mxu0
    %1414 = vmatprep.subr.mxu0 0.0
    %1415 = vmatpush1.xpose.msra.mxu0 %v1252
    %1416 = vmatprep.subr.mxu0 0.0
    %1417 = vmatpush1.xpose.msra.mxu0 0.0
    %1418 = vmatprep.subr.mxu0 0.0
    %1419 = vmatpush1.xpose.msra.mxu0 0.0
    %1420 = vmatprep.subr.mxu0 0.0
    %1421 = vmatpush1.xpose.msra.mxu0 0.0
    %1422 = vmatprep.subr.mxu0 0.0
    %1423 = vmatpush1.xpose.msra.mxu0 0.0
    %1424 = vmatprep.subr.mxu0 0.0
    %1425 = vmatpush1.xpose.msra.mxu0 0.0
    %1426 = vmatprep.subr.mxu0 0.0
    %1427 = vmatpush1.xpose.msra.mxu0 0.0
    %1428 = vmatprep.subr.mxu0 0.0
    %1429 = vmatpush1.xpose.msra.mxu0 0.0
    %1430 = vmatprep.subr.mxu0 0.0
    %1431 = vmatpush1.xpose.msra.mxu0 0.0
    %1432 = vmatprep.subr.mxu0 0.0
    %1433 = vmatpush1.xpose.msra.mxu0 0.0
    %1434 = vmatprep.subr.mxu0 0.0
    %1435 = vmatpush1.xpose.msra.mxu0 0.0
    %1436 = vmatprep.subr.mxu0 0.0
    %1437 = vmatpush1.xpose.msra.mxu0 0.0
    %1438 = vmatprep.subr.mxu0 0.0
    %1439 = vmatpush1.xpose.msra.mxu0 0.0
    %1440 = vmatprep.subr.mxu0 0.0
    %1441 = vmatpush1.xpose.msra.mxu0 0.0
    %1442 = vmatprep.subr.mxu0 0.0
    %1443 = vmatpush1.xpose.msra.mxu0 0.0
    %1444 = vmatprep.subr.mxu0 0.0
    %1445 = vmatpush1.xpose.msra.mxu0 0.0
    %1446 = vmatprep.subr.mxu0 0.0
    %1447 = vmatpush1.xpose.msra.mxu0 0.0
    %1448 = vmatprep.subr.mxu0 0.0
    %1449 = vmatpush1.xpose.msra.mxu0 0.0
    %1450 = vmatprep.subr.mxu0 0.0
    %1451 = vmatpush1.xpose.msra.mxu0 0.0
    %1452 = vmatprep.subr.mxu0 0.0
    %1453 = vmatpush1.xpose.msra.mxu0 0.0
    %1454 = vmatprep.subr.mxu0 0.0
    %1455 = vmatpush1.xpose.msra.mxu0 0.0
    %1456 = vmatprep.subr.mxu0 0.0
    %1457 = vmatpush1.xpose.msra.mxu0 0.0
    %1458 = vmatprep.subr.mxu0 0.0
    %1459 = vmatpush1.xpose.msra.mxu0 0.0
    %1460 = vmatprep.subr.mxu0 0.0
    %1461 = vmatpush1.xpose.msra.mxu0 0.0
    %1462 = vmatprep.subr.mxu0 0.0
    %1463 = vmatpush1.xpose.msra.mxu0 0.0
    %1464 = vmatprep.subr.mxu0 0.0
    %1465 = vmatpush1.xpose.msra.mxu0 0.0
    %1466 = vmatprep.subr.mxu0 0.0
    %1467 = vmatpush1.xpose.msra.mxu0 0.0
    %1468 = vmatprep.subr.mxu0 0.0
    %1469 = vmatpush1.xpose.msra.mxu0 0.0
    %1470 = vmatprep.subr.mxu0 0.0
    %1471 = vmatpush1.xpose.msra.mxu0 0.0
    %1472 = vmatprep.subr.mxu0 0.0
    %1473 = vmatpush1.xpose.msra.mxu0 0.0
    %1474 = vmatprep.subr.mxu0 0.0
    %1475 = vmatpush1.xpose.msra.mxu0 0.0
    %1476 = vmatprep.subr.mxu0 0.0
    %1477 = vmatpush1.xpose.msra.mxu0 0.0
    %1478 = vmatprep.mubr.f32.mxu0 0.0
    %1479 = vmatmul.mubr.f32.gmra.mrb[0].mxu0 %v1250
    %v1480 = vpop.f32.mrb[0].mxu0
    %v1481 = vadd.f32 0.0, %v1480
    %v1482 = vpop.f32.mrb[0].mxu0
    %1483 = vdwg.mxu0
    %1484 = vmatprep.subr.mxu0 0.0
    %1485 = vmatpush1.xpose.msra.mxu0 %v1258
    %1486 = vmatprep.subr.mxu0 0.0
    %1487 = vmatpush1.xpose.msra.mxu0 0.0
    %1488 = vmatprep.subr.mxu0 0.0
    %1489 = vmatpush1.xpose.msra.mxu0 0.0
    %1490 = vmatprep.subr.mxu0 0.0
    %1491 = vmatpush1.xpose.msra.mxu0 0.0
    %1492 = vmatprep.subr.mxu0 0.0
    %1493 = vmatpush1.xpose.msra.mxu0 0.0
    %1494 = vmatprep.subr.mxu0 0.0
    %1495 = vmatpush1.xpose.msra.mxu0 0.0
    %1496 = vmatprep.subr.mxu0 0.0
    %1497 = vmatpush1.xpose.msra.mxu0 0.0
    %1498 = vmatprep.subr.mxu0 0.0
    %1499 = vmatpush1.xpose.msra.mxu0 0.0
    %1500 = vmatprep.subr.mxu0 0.0
    %1501 = vmatpush1.xpose.msra.mxu0 0.0
    %1502 = vmatprep.subr.mxu0 0.0
    %1503 = vmatpush1.xpose.msra.mxu0 0.0
    %1504 = vmatprep.subr.mxu0 0.0
    %1505 = vmatpush1.xpose.msra.mxu0 0.0
    %1506 = vmatprep.subr.mxu0 0.0
    %1507 = vmatpush1.xpose.msra.mxu0 0.0
    %1508 = vmatprep.subr.mxu0 0.0
    %1509 = vmatpush1.xpose.msra.mxu0 0.0
    %1510 = vmatprep.subr.mxu0 0.0
    %1511 = vmatpush1.xpose.msra.mxu0 0.0
    %1512 = vmatprep.subr.mxu0 0.0
    %1513 = vmatpush1.xpose.msra.mxu0 0.0
    %1514 = vmatprep.subr.mxu0 0.0
    %1515 = vmatpush1.xpose.msra.mxu0 0.0
    %1516 = vmatprep.subr.mxu0 0.0
    %1517 = vmatpush1.xpose.msra.mxu0 0.0
    %1518 = vmatprep.subr.mxu0 0.0
    %1519 = vmatpush1.xpose.msra.mxu0 0.0
    %1520 = vmatprep.subr.mxu0 0.0
    %1521 = vmatpush1.xpose.msra.mxu0 0.0
    %1522 = vmatprep.subr.mxu0 0.0
    %1523 = vmatpush1.xpose.msra.mxu0 0.0
    %1524 = vmatprep.subr.mxu0 0.0
    %1525 = vmatpush1.xpose.msra.mxu0 0.0
    %1526 = vmatprep.subr.mxu0 0.0
    %1527 = vmatpush1.xpose.msra.mxu0 0.0
    %1528 = vmatprep.subr.mxu0 0.0
    %1529 = vmatpush1.xpose.msra.mxu0 0.0
    %1530 = vmatprep.subr.mxu0 0.0
    %1531 = vmatpush1.xpose.msra.mxu0 0.0
    %1532 = vmatprep.subr.mxu0 0.0
    %1533 = vmatpush1.xpose.msra.mxu0 0.0
    %1534 = vmatprep.subr.mxu0 0.0
    %1535 = vmatpush1.xpose.msra.mxu0 0.0
    %1536 = vmatprep.subr.mxu0 0.0
    %1537 = vmatpush1.xpose.msra.mxu0 0.0
    %1538 = vmatprep.subr.mxu0 0.0
    %1539 = vmatpush1.xpose.msra.mxu0 0.0
    %1540 = vmatprep.subr.mxu0 0.0
    %1541 = vmatpush1.xpose.msra.mxu0 0.0
    %1542 = vmatprep.subr.mxu0 0.0
    %1543 = vmatpush1.xpose.msra.mxu0 0.0
    %1544 = vmatprep.subr.mxu0 0.0
    %1545 = vmatpush1.xpose.msra.mxu0 0.0
    %1546 = vmatprep.subr.mxu0 0.0
    %1547 = vmatpush1.xpose.msra.mxu0 0.0
    %1548 = vmatprep.mubr.f32.mxu0 0.0
    %1549 = vmatmul.mubr.f32.gmra.mrb[0].mxu0 %v1256
    %v1550 = vpop.f32.mrb[0].mxu0
    %v1551 = vadd.f32 0.0, %v1550
    %v1552 = vpop.f32.mrb[0].mxu0
    %1553 = vdwg.mxu0
    %v1554 = vmul.f32 %v1481, 0.4472136
    %v1555 = vmul.f32 %v1551, 0.4472136
    %v1556 = vsel %vm480, %v1554, -inf
    %1557 = vmax.xlane.f32.xlu0 %v1556
    %v1558 = vpop.xlane.xlu0 %1557
    %v1559 = vsel %vm480, %v1555, -inf
    %1560 = vmax.xlane.f32.xlu0 %v1559
    %v1561 = vpop.xlane.xlu0 %1560
    %v1562 = vsub.f32 %v1554, %v1558
    %v1563 = vsub.f32 %v1555, %v1561
    %v1564 = vmul.f32 %v1562, 1.442695
    %v1565 = vpow.pop %v1564
    %v1566 = vmul.f32 %v1563, 1.442695
    %v1567 = vpow.pop %v1566
    %v1568 = vsel %vm480, %v1565, 0.0
    %1569 = vadd.xlane.f32.xlu0 %v1568
    %v1570 = vpop.xlane.xlu0 %1569
    %v1571 = vsel %vm480, %v1567, 0.0
    %1572 = vadd.xlane.f32.xlu0 %v1571
    %v1573 = vpop.xlane.xlu0 %1572
    %v1574 = vrcp.pop %v1570
    %v1575 = vmul.f32 %v1565, %v1574
    %v1576 = vrcp.pop %v1573
    %v1577 = vmul.f32 %v1567, %v1576
    %v1579 = vsel %vm480, %v1575, 0
    %1581 = vmatprep.subr.mxu0 0.0
    %1582 = vmatpush1.msra.mxu0 %v1327
    %1583 = vmatprep.subr.mxu0 0.0
    %1584 = vmatpush1.msra.mxu0 0.0
    %1585 = vmatprep.subr.mxu0 0.0
    %1586 = vmatpush1.msra.mxu0 0.0
    %1587 = vmatprep.subr.mxu0 0.0
    %1588 = vmatpush1.msra.mxu0 0.0
    %1589 = vmatprep.subr.mxu0 0.0
    %1590 = vmatpush1.msra.mxu0 0.0
    %1591 = vmatprep.subr.mxu0 0.0
    %1592 = vmatpush1.msra.mxu0 0.0
    %1593 = vmatprep.subr.mxu0 0.0
    %1594 = vmatpush1.msra.mxu0 0.0
    %1595 = vmatprep.subr.mxu0 0.0
    %1596 = vmatpush1.msra.mxu0 0.0
    %1597 = vmatprep.subr.mxu0 0.0
    %1598 = vmatpush1.msra.mxu0 0.0
    %1599 = vmatprep.subr.mxu0 0.0
    %1600 = vmatpush1.msra.mxu0 0.0
    %1601 = vmatprep.subr.mxu0 0.0
    %1602 = vmatpush1.msra.mxu0 0.0
    %1603 = vmatprep.subr.mxu0 0.0
    %1604 = vmatpush1.msra.mxu0 0.0
    %1605 = vmatprep.subr.mxu0 0.0
    %1606 = vmatpush1.msra.mxu0 0.0
    %1607 = vmatprep.subr.mxu0 0.0
    %1608 = vmatpush1.msra.mxu0 0.0
    %1609 = vmatprep.subr.mxu0 0.0
    %1610 = vmatpush1.msra.mxu0 0.0
    %1611 = vmatprep.subr.mxu0 0.0
    %1612 = vmatpush1.msra.mxu0 0.0
    %1613 = vmatprep.subr.mxu0 0.0
    %1614 = vmatpush1.msra.mxu0 0.0
    %1615 = vmatprep.subr.mxu0 0.0
    %1616 = vmatpush1.msra.mxu0 0.0
    %1617 = vmatprep.subr.mxu0 0.0
    %1618 = vmatpush1.msra.mxu0 0.0
    %1619 = vmatprep.subr.mxu0 0.0
    %1620 = vmatpush1.msra.mxu0 0.0
    %1621 = vmatprep.subr.mxu0 0.0
    %1622 = vmatpush1.msra.mxu0 0.0
    %1623 = vmatprep.subr.mxu0 0.0
    %1624 = vmatpush1.msra.mxu0 0.0
    %1625 = vmatprep.subr.mxu0 0.0
    %1626 = vmatpush1.msra.mxu0 0.0
    %1627 = vmatprep.subr.mxu0 0.0
    %1628 = vmatpush1.msra.mxu0 0.0
    %1629 = vmatprep.subr.mxu0 0.0
    %1630 = vmatpush1.msra.mxu0 0.0
    %1631 = vmatprep.subr.mxu0 0.0
    %1632 = vmatpush1.msra.mxu0 0.0
    %1633 = vmatprep.subr.mxu0 0.0
    %1634 = vmatpush1.msra.mxu0 0.0
    %1635 = vmatprep.subr.mxu0 0.0
    %1636 = vmatpush1.msra.mxu0 0.0
    %1637 = vmatprep.subr.mxu0 0.0
    %1638 = vmatpush1.msra.mxu0 0.0
    %1639 = vmatprep.subr.mxu0 0.0
    %1640 = vmatpush1.msra.mxu0 0.0
    %1641 = vmatprep.subr.mxu0 0.0
    %1642 = vmatpush1.msra.mxu0 0.0
    %1643 = vmatprep.subr.mxu0 0.0
    %1644 = vmatpush1.msra.mxu0 0.0
    %1645 = vmatprep.mubr.f32.mxu0 0.0
    %1646 = vmatmul.mubr.f32.gmra.mrb[0].mxu0 %v1579
    %v1647 = vpop.f32.mrb[0].mxu0
    %v1648 = vadd.f32 0.0, %v1647
    %v1649 = vpop.f32.mrb[0].mxu0
    %1650 = vdwg.mxu0
    %v1652 = vsel %vm480, %v1577, 0
    %1654 = vmatprep.subr.mxu0 0.0
    %1655 = vmatpush1.msra.mxu0 %v1333
    %1656 = vmatprep.subr.mxu0 0.0
    %1657 = vmatpush1.msra.mxu0 0.0
    %1658 = vmatprep.subr.mxu0 0.0
    %1659 = vmatpush1.msra.mxu0 0.0
    %1660 = vmatprep.subr.mxu0 0.0
    %1661 = vmatpush1.msra.mxu0 0.0
    %1662 = vmatprep.subr.mxu0 0.0
    %1663 = vmatpush1.msra.mxu0 0.0
    %1664 = vmatprep.subr.mxu0 0.0
    %1665 = vmatpush1.msra.mxu0 0.0
    %1666 = vmatprep.subr.mxu0 0.0
    %1667 = vmatpush1.msra.mxu0 0.0
    %1668 = vmatprep.subr.mxu0 0.0
    %1669 = vmatpush1.msra.mxu0 0.0
    %1670 = vmatprep.subr.mxu0 0.0
    %1671 = vmatpush1.msra.mxu0 0.0
    %1672 = vmatprep.subr.mxu0 0.0
    %1673 = vmatpush1.msra.mxu0 0.0
    %1674 = vmatprep.subr.mxu0 0.0
    %1675 = vmatpush1.msra.mxu0 0.0
    %1676 = vmatprep.subr.mxu0 0.0
    %1677 = vmatpush1.msra.mxu0 0.0
    %1678 = vmatprep.subr.mxu0 0.0
    %1679 = vmatpush1.msra.mxu0 0.0
    %1680 = vmatprep.subr.mxu0 0.0
    %1681 = vmatpush1.msra.mxu0 0.0
    %1682 = vmatprep.subr.mxu0 0.0
    %1683 = vmatpush1.msra.mxu0 0.0
    %1684 = vmatprep.subr.mxu0 0.0
    %1685 = vmatpush1.msra.mxu0 0.0
    %1686 = vmatprep.subr.mxu0 0.0
    %1687 = vmatpush1.msra.mxu0 0.0
    %1688 = vmatprep.subr.mxu0 0.0
    %1689 = vmatpush1.msra.mxu0 0.0
    %1690 = vmatprep.subr.mxu0 0.0
    %1691 = vmatpush1.msra.mxu0 0.0
    %1692 = vmatprep.subr.mxu0 0.0
    %1693 = vmatpush1.msra.mxu0 0.0
    %1694 = vmatprep.subr.mxu0 0.0
    %1695 = vmatpush1.msra.mxu0 0.0
    %1696 = vmatprep.subr.mxu0 0.0
    %1697 = vmatpush1.msra.mxu0 0.0
    %1698 = vmatprep.subr.mxu0 0.0
    %1699 = vmatpush1.msra.mxu0 0.0
    %1700 = vmatprep.subr.mxu0 0.0
    %1701 = vmatpush1.msra.mxu0 0.0
    %1702 = vmatprep.subr.mxu0 0.0
    %1703 = vmatpush1.msra.mxu0 0.0
    %1704 = vmatprep.subr.mxu0 0.0
    %1705 = vmatpush1.msra.mxu0 0.0
    %1706 = vmatprep.subr.mxu0 0.0
    %1707 = vmatpush1.msra.mxu0 0.0
    %1708 = vmatprep.subr.mxu0 0.0
    %1709 = vmatpush1.msra.mxu0 0.0
    %1710 = vmatprep.subr.mxu0 0.0
    %1711 = vmatpush1.msra.mxu0 0.0
    %1712 = vmatprep.subr.mxu0 0.0
    %1713 = vmatpush1.msra.mxu0 0.0
    %1714 = vmatprep.subr.mxu0 0.0
    %1715 = vmatpush1.msra.mxu0 0.0
    %1716 = vmatprep.subr.mxu0 0.0
    %1717 = vmatpush1.msra.mxu0 0.0
    %1718 = vmatprep.mubr.f32.mxu0 0.0
    %1719 = vmatmul.mubr.f32.gmra.mrb[0].mxu0 %v1652
    %v1720 = vpop.f32.mrb[0].mxu0
    %v1721 = vadd.f32 0.0, %v1720
    %v1722 = vpop.f32.mrb[0].mxu0
    %1723 = vdwg.mxu0
    %1724 = vmatprep.subr.mxu0 0.0
    %1725 = vmatpush1.xpose.msra.mxu0 %v1404
    %1726 = vmatprep.subr.mxu0 0.0
    %1727 = vmatpush1.xpose.msra.mxu0 0.0
    %1728 = vmatprep.subr.mxu0 0.0
    %1729 = vmatpush1.xpose.msra.mxu0 0.0
    %1730 = vmatprep.subr.mxu0 0.0
    %1731 = vmatpush1.xpose.msra.mxu0 0.0
    %1732 = vmatprep.subr.mxu0 0.0
    %1733 = vmatpush1.xpose.msra.mxu0 0.0
    %1734 = vmatprep.subr.mxu0 0.0
    %1735 = vmatpush1.xpose.msra.mxu0 0.0
    %1736 = vmatprep.subr.mxu0 0.0
    %1737 = vmatpush1.xpose.msra.mxu0 0.0
    %1738 = vmatprep.subr.mxu0 0.0
    %1739 = vmatpush1.xpose.msra.mxu0 0.0
    %1740 = vmatprep.subr.mxu0 0.0
    %1741 = vmatpush1.xpose.msra.mxu0 0.0
    %1742 = vmatprep.subr.mxu0 0.0
    %1743 = vmatpush1.xpose.msra.mxu0 0.0
    %1744 = vmatprep.subr.mxu0 0.0
    %1745 = vmatpush1.xpose.msra.mxu0 0.0
    %1746 = vmatprep.subr.mxu0 0.0
    %1747 = vmatpush1.xpose.msra.mxu0 0.0
    %1748 = vmatprep.subr.mxu0 0.0
    %1749 = vmatpush1.xpose.msra.mxu0 0.0
    %1750 = vmatprep.subr.mxu0 0.0
    %1751 = vmatpush1.xpose.msra.mxu0 0.0
    %1752 = vmatprep.subr.mxu0 0.0
    %1753 = vmatpush1.xpose.msra.mxu0 0.0
    %1754 = vmatprep.subr.mxu0 0.0
    %1755 = vmatpush1.xpose.msra.mxu0 0.0
    %1756 = vmatprep.subr.mxu0 0.0
    %1757 = vmatpush1.xpose.msra.mxu0 0.0
    %1758 = vmatprep.subr.mxu0 0.0
    %1759 = vmatpush1.xpose.msra.mxu0 0.0
    %1760 = vmatprep.subr.mxu0 0.0
    %1761 = vmatpush1.xpose.msra.mxu0 0.0
    %1762 = vmatprep.subr.mxu0 0.0
    %1763 = vmatpush1.xpose.msra.mxu0 0.0
    %1764 = vmatprep.subr.mxu0 0.0
    %1765 = vmatpush1.xpose.msra.mxu0 0.0
    %1766 = vmatprep.subr.mxu0 0.0
    %1767 = vmatpush1.xpose.msra.mxu0 0.0
    %1768 = vmatprep.subr.mxu0 0.0
    %1769 = vmatpush1.xpose.msra.mxu0 0.0
    %1770 = vmatprep.subr.mxu0 0.0
    %1771 = vmatpush1.xpose.msra.mxu0 0.0
    %1772 = vmatprep.subr.mxu0 0.0
    %1773 = vmatpush1.xpose.msra.mxu0 0.0
    %1774 = vmatprep.subr.mxu0 0.0
    %1775 = vmatpush1.xpose.msra.mxu0 0.0
    %1776 = vmatprep.subr.mxu0 0.0
    %1777 = vmatpush1.xpose.msra.mxu0 0.0
    %1778 = vmatprep.subr.mxu0 0.0
    %1779 = vmatpush1.xpose.msra.mxu0 0.0
    %1780 = vmatprep.subr.mxu0 0.0
    %1781 = vmatpush1.xpose.msra.mxu0 0.0
    %1782 = vmatprep.subr.mxu0 0.0
    %1783 = vmatpush1.xpose.msra.mxu0 0.0
    %1784 = vmatprep.subr.mxu0 0.0
    %1785 = vmatpush1.xpose.msra.mxu0 0.0
    %1786 = vmatprep.subr.mxu0 0.0
    %1787 = vmatpush1.xpose.msra.mxu0 0.0
    %1788 = vmatprep.mubr.f32.mxu0 0.0
    %1789 = vmatmul.mubr.f32.gmra.mrb[0].mxu0 %v1329
    %v1790 = vpop.f32.mrb[0].mxu0
    %v1791 = vadd.f32 0.0, %v1790
    %v1792 = vpop.f32.mrb[0].mxu0
    %1793 = vdwg.mxu0
    %1794 = vmatprep.subr.mxu0 0.0
    %1795 = vmatpush1.xpose.msra.mxu0 %v1410
    %1796 = vmatprep.subr.mxu0 0.0
    %1797 = vmatpush1.xpose.msra.mxu0 0.0
    %1798 = vmatprep.subr.mxu0 0.0
    %1799 = vmatpush1.xpose.msra.mxu0 0.0
    %1800 = vmatprep.subr.mxu0 0.0
    %1801 = vmatpush1.xpose.msra.mxu0 0.0
    %1802 = vmatprep.subr.mxu0 0.0
    %1803 = vmatpush1.xpose.msra.mxu0 0.0
    %1804 = vmatprep.subr.mxu0 0.0
    %1805 = vmatpush1.xpose.msra.mxu0 0.0
    %1806 = vmatprep.subr.mxu0 0.0
    %1807 = vmatpush1.xpose.msra.mxu0 0.0
    %1808 = vmatprep.subr.mxu0 0.0
    %1809 = vmatpush1.xpose.msra.mxu0 0.0
    %1810 = vmatprep.subr.mxu0 0.0
    %1811 = vmatpush1.xpose.msra.mxu0 0.0
    %1812 = vmatprep.subr.mxu0 0.0
    %1813 = vmatpush1.xpose.msra.mxu0 0.0
    %1814 = vmatprep.subr.mxu0 0.0
    %1815 = vmatpush1.xpose.msra.mxu0 0.0
    %1816 = vmatprep.subr.mxu0 0.0
    %1817 = vmatpush1.xpose.msra.mxu0 0.0
    %1818 = vmatprep.subr.mxu0 0.0
    %1819 = vmatpush1.xpose.msra.mxu0 0.0
    %1820 = vmatprep.subr.mxu0 0.0
    %1821 = vmatpush1.xpose.msra.mxu0 0.0
    %1822 = vmatprep.subr.mxu0 0.0
    %1823 = vmatpush1.xpose.msra.mxu0 0.0
    %1824 = vmatprep.subr.mxu0 0.0
    %1825 = vmatpush1.xpose.msra.mxu0 0.0
    %1826 = vmatprep.subr.mxu0 0.0
    %1827 = vmatpush1.xpose.msra.mxu0 0.0
    %1828 = vmatprep.subr.mxu0 0.0
    %1829 = vmatpush1.xpose.msra.mxu0 0.0
    %1830 = vmatprep.subr.mxu0 0.0
    %1831 = vmatpush1.xpose.msra.mxu0 0.0
    %1832 = vmatprep.subr.mxu0 0.0
    %1833 = vmatpush1.xpose.msra.mxu0 0.0
    %1834 = vmatprep.subr.mxu0 0.0
    %1835 = vmatpush1.xpose.msra.mxu0 0.0
    %1836 = vmatprep.subr.mxu0 0.0
    %1837 = vmatpush1.xpose.msra.mxu0 0.0
    %1838 = vmatprep.subr.mxu0 0.0
    %1839 = vmatpush1.xpose.msra.mxu0 0.0
    %1840 = vmatprep.subr.mxu0 0.0
    %1841 = vmatpush1.xpose.msra.mxu0 0.0
    %1842 = vmatprep.subr.mxu0 0.0
    %1843 = vmatpush1.xpose.msra.mxu0 0.0
    %1844 = vmatprep.subr.mxu0 0.0
    %1845 = vmatpush1.xpose.msra.mxu0 0.0
    %1846 = vmatprep.subr.mxu0 0.0
    %1847 = vmatpush1.xpose.msra.mxu0 0.0
    %1848 = vmatprep.subr.mxu0 0.0
    %1849 = vmatpush1.xpose.msra.mxu0 0.0
    %1850 = vmatprep.subr.mxu0 0.0
    %1851 = vmatpush1.xpose.msra.mxu0 0.0
    %1852 = vmatprep.subr.mxu0 0.0
    %1853 = vmatpush1.xpose.msra.mxu0 0.0
    %1854 = vmatprep.subr.mxu0 0.0
    %1855 = vmatpush1.xpose.msra.mxu0 0.0
    %1856 = vmatprep.subr.mxu0 0.0
    %1857 = vmatpush1.xpose.msra.mxu0 0.0
    %1858 = vmatprep.mubr.f32.mxu0 0.0
    %1859 = vmatmul.mubr.f32.gmra.mrb[0].mxu0 %v1335
    %v1860 = vpop.f32.mrb[0].mxu0
    %v1861 = vadd.f32 0.0, %v1860
    %v1862 = vpop.f32.mrb[0].mxu0
    %1863 = vdwg.mxu0
    %v1864 = vmul.f32 %v1791, 0.4472136
    %v1865 = vmul.f32 %v1861, 0.4472136
    %v1866 = vsel %vm480, %v1864, -inf
    %1867 = vmax.xlane.f32.xlu0 %v1866
    %v1868 = vpop.xlane.xlu0 %1867
    %v1869 = vsel %vm480, %v1865, -inf
    %1870 = vmax.xlane.f32.xlu0 %v1869
    %v1871 = vpop.xlane.xlu0 %1870
    %v1872 = vsub.f32 %v1864, %v1868
    %v1873 = vsub.f32 %v1865, %v1871
    %v1874 = vmul.f32 %v1872, 1.442695
    %v1875 = vpow.pop %v1874
    %v1876 = vmul.f32 %v1873, 1.442695
    %v1877 = vpow.pop %v1876
    %v1878 = vsel %vm480, %v1875, 0.0
    %1879 = vadd.xlane.f32.xlu0 %v1878
    %v1880 = vpop.xlane.xlu0 %1879
    %v1881 = vsel %vm480, %v1877, 0.0
    %1882 = vadd.xlane.f32.xlu0 %v1881
    %v1883 = vpop.xlane.xlu0 %1882
    %v1884 = vrcp.pop %v1880
    %v1885 = vmul.f32 %v1875, %v1884
    %v1886 = vrcp.pop %v1883
    %v1887 = vmul.f32 %v1877, %v1886
    %v1889 = vsel %vm480, %v1885, 0
    %1891 = vmatprep.subr.mxu0 0.0
    %1892 = vmatpush1.msra.mxu0 %v1406
    %1893 = vmatprep.subr.mxu0 0.0
    %1894 = vmatpush1.msra.mxu0 0.0
    %1895 = vmatprep.subr.mxu0 0.0
    %1896 = vmatpush1.msra.mxu0 0.0
    %1897 = vmatprep.subr.mxu0 0.0
    %1898 = vmatpush1.msra.mxu0 0.0
    %1899 = vmatprep.subr.mxu0 0.0
    %1900 = vmatpush1.msra.mxu0 0.0
    %1901 = vmatprep.subr.mxu0 0.0
    %1902 = vmatpush1.msra.mxu0 0.0
    %1903 = vmatprep.subr.mxu0 0.0
    %1904 = vmatpush1.msra.mxu0 0.0
    %1905 = vmatprep.subr.mxu0 0.0
    %1906 = vmatpush1.msra.mxu0 0.0
    %1907 = vmatprep.subr.mxu0 0.0
    %1908 = vmatpush1.msra.mxu0 0.0
    %1909 = vmatprep.subr.mxu0 0.0
    %1910 = vmatpush1.msra.mxu0 0.0
    %1911 = vmatprep.subr.mxu0 0.0
    %1912 = vmatpush1.msra.mxu0 0.0
    %1913 = vmatprep.subr.mxu0 0.0
    %1914 = vmatpush1.msra.mxu0 0.0
    %1915 = vmatprep.subr.mxu0 0.0
    %1916 = vmatpush1.msra.mxu0 0.0
    %1917 = vmatprep.subr.mxu0 0.0
    %1918 = vmatpush1.msra.mxu0 0.0
    %1919 = vmatprep.subr.mxu0 0.0
    %1920 = vmatpush1.msra.mxu0 0.0
    %1921 = vmatprep.subr.mxu0 0.0
    %1922 = vmatpush1.msra.mxu0 0.0
    %1923 = vmatprep.subr.mxu0 0.0
    %1924 = vmatpush1.msra.mxu0 0.0
    %1925 = vmatprep.subr.mxu0 0.0
    %1926 = vmatpush1.msra.mxu0 0.0
    %1927 = vmatprep.subr.mxu0 0.0
    %1928 = vmatpush1.msra.mxu0 0.0
    %1929 = vmatprep.subr.mxu0 0.0
    %1930 = vmatpush1.msra.mxu0 0.0
    %1931 = vmatprep.subr.mxu0 0.0
    %1932 = vmatpush1.msra.mxu0 0.0
    %1933 = vmatprep.subr.mxu0 0.0
    %1934 = vmatpush1.msra.mxu0 0.0
    %1935 = vmatprep.subr.mxu0 0.0
    %1936 = vmatpush1.msra.mxu0 0.0
    %1937 = vmatprep.subr.mxu0 0.0
    %1938 = vmatpush1.msra.mxu0 0.0
    %1939 = vmatprep.subr.mxu0 0.0
    %1940 = vmatpush1.msra.mxu0 0.0
    %1941 = vmatprep.subr.mxu0 0.0
    %1942 = vmatpush1.msra.mxu0 0.0
    %1943 = vmatprep.subr.mxu0 0.0
    %1944 = vmatpush1.msra.mxu0 0.0
    %1945 = vmatprep.subr.mxu0 0.0
    %1946 = vmatpush1.msra.mxu0 0.0
    %1947 = vmatprep.subr.mxu0 0.0
    %1948 = vmatpush1.msra.mxu0 0.0
    %1949 = vmatprep.subr.mxu0 0.0
    %1950 = vmatpush1.msra.mxu0 0.0
    %1951 = vmatprep.subr.mxu0 0.0
    %1952 = vmatpush1.msra.mxu0 0.0
    %1953 = vmatprep.subr.mxu0 0.0
    %1954 = vmatpush1.msra.mxu0 0.0
    %1955 = vmatprep.mubr.f32.mxu0 0.0
    %1956 = vmatmul.mubr.f32.gmra.mrb[0].mxu0 %v1889
    %v1957 = vpop.f32.mrb[0].mxu0
    %v1958 = vadd.f32 0.0, %v1957
    %v1959 = vpop.f32.mrb[0].mxu0
    %1960 = vdwg.mxu0
    %v1962 = vsel %vm480, %v1887, 0
    %1964 = vmatprep.subr.mxu0 0.0
    %1965 = vmatpush1.msra.mxu0 %v1412
    %1966 = vmatprep.subr.mxu0 0.0
    %1967 = vmatpush1.msra.mxu0 0.0
    %1968 = vmatprep.subr.mxu0 0.0
    %1969 = vmatpush1.msra.mxu0 0.0
    %1970 = vmatprep.subr.mxu0 0.0
    %1971 = vmatpush1.msra.mxu0 0.0
    %1972 = vmatprep.subr.mxu0 0.0
    %1973 = vmatpush1.msra.mxu0 0.0
    %1974 = vmatprep.subr.mxu0 0.0
    %1975 = vmatpush1.msra.mxu0 0.0
    %1976 = vmatprep.subr.mxu0 0.0
    %1977 = vmatpush1.msra.mxu0 0.0
    %1978 = vmatprep.subr.mxu0 0.0
    %1979 = vmatpush1.msra.mxu0 0.0
    %1980 = vmatprep.subr.mxu0 0.0
    %1981 = vmatpush1.msra.mxu0 0.0
    %1982 = vmatprep.subr.mxu0 0.0
    %1983 = vmatpush1.msra.mxu0 0.0
    %1984 = vmatprep.subr.mxu0 0.0
    %1985 = vmatpush1.msra.mxu0 0.0
    %1986 = vmatprep.subr.mxu0 0.0
    %1987 = vmatpush1.msra.mxu0 0.0
    %1988 = vmatprep.subr.mxu0 0.0
    %1989 = vmatpush1.msra.mxu0 0.0
    %1990 = vmatprep.subr.mxu0 0.0
    %1991 = vmatpush1.msra.mxu0 0.0
    %1992 = vmatprep.subr.mxu0 0.0
    %1993 = vmatpush1.msra.mxu0 0.0
    %1994 = vmatprep.subr.mxu0 0.0
    %1995 = vmatpush1.msra.mxu0 0.0
    %1996 = vmatprep.subr.mxu0 0.0
    %1997 = vmatpush1.msra.mxu0 0.0
    %1998 = vmatprep.subr.mxu0 0.0
    %1999 = vmatpush1.msra.mxu0 0.0
    %2000 = vmatprep.subr.mxu0 0.0
    %2001 = vmatpush1.msra.mxu0 0.0
    %2002 = vmatprep.subr.mxu0 0.0
    %2003 = vmatpush1.msra.mxu0 0.0
    %2004 = vmatprep.subr.mxu0 0.0
    %2005 = vmatpush1.msra.mxu0 0.0
    %2006 = vmatprep.subr.mxu0 0.0
    %2007 = vmatpush1.msra.mxu0 0.0
    %2008 = vmatprep.subr.mxu0 0.0
    %2009 = vmatpush1.msra.mxu0 0.0
    %2010 = vmatprep.subr.mxu0 0.0
    %2011 = vmatpush1.msra.mxu0 0.0
    %2012 = vmatprep.subr.mxu0 0.0
    %2013 = vmatpush1.msra.mxu0 0.0
    %2014 = vmatprep.subr.mxu0 0.0
    %2015 = vmatpush1.msra.mxu0 0.0
    %2016 = vmatprep.subr.mxu0 0.0
    %2017 = vmatpush1.msra.mxu0 0.0
    %2018 = vmatprep.subr.mxu0 0.0
    %2019 = vmatpush1.msra.mxu0 0.0
    %2020 = vmatprep.subr.mxu0 0.0
    %2021 = vmatpush1.msra.mxu0 0.0
    %2022 = vmatprep.subr.mxu0 0.0
    %2023 = vmatpush1.msra.mxu0 0.0
    %2024 = vmatprep.subr.mxu0 0.0
    %2025 = vmatpush1.msra.mxu0 0.0
    %2026 = vmatprep.subr.mxu0 0.0
    %2027 = vmatpush1.msra.mxu0 0.0
    %2028 = vmatprep.mubr.f32.mxu0 0.0
    %2029 = vmatmul.mubr.f32.gmra.mrb[0].mxu0 %v1962
    %v2030 = vpop.f32.mrb[0].mxu0
    %v2031 = vadd.f32 0.0, %v2030
    %v2032 = vpop.f32.mrb[0].mxu0
    %2033 = vdwg.mxu0
    %v2034 = vld [vmem:[%s2 + $0x100] sm:$0xff]
    %v2035 = vld [vmem:[%s2 + $0x108] sm:$0xff]
    %v2036 = vld [vmem:[%s2 + $0x110] sm:$0xff]
    %v2037 = vld [vmem:[%s2 + $0x118] sm:$0xff]
    %v2038 = vld [vmem:[%s2 + $0x120] sm:$0xff]
    %v2039 = vld [vmem:[%s2 + $0x128] sm:$0xff]
    %v2040 = vld [vmem:[%s2 + $0x130] sm:$0xff]
    %v2041 = vld [vmem:[%s2 + $0x138] sm:$0xff]
    %v2042 = vld [vmem:[%s2 + $0x140] sm:$0xff]
    %v2043 = vld [vmem:[%s2 + $0x148] sm:$0xff]
    %v2044 = vld [vmem:[%s2 + $0x150] sm:$0xff]
    %v2045 = vld [vmem:[%s2 + $0x158] sm:$0xff]
    %v2046 = vld [vmem:[%s2 + $0x160] sm:$0xff]
    %v2047 = vld [vmem:[%s2 + $0x168] sm:$0xff]
    %v2048 = vld [vmem:[%s2 + $0x170] sm:$0xff]
    %v2049 = vld [vmem:[%s2 + $0x178] sm:$0xff]
    %v2050 = vld [vmem:[%s2 + $0x180] sm:$0xff]
    %v2051 = vld [vmem:[%s2 + $0x188] sm:$0xff]
    %v2052 = vld [vmem:[%s2 + $0x190] sm:$0xff]
    %v2053 = vld [vmem:[%s2 + $0x198] sm:$0xff]
    %v2054 = vld [vmem:[%s2 + $0x1a0] sm:$0xff]
    %v2055 = vld [vmem:[%s2 + $0x1a8] sm:$0xff]
    %v2056 = vld [vmem:[%s2 + $0x1b0] sm:$0xff]
    %v2057 = vld [vmem:[%s2 + $0x1b8] sm:$0xff]
    %v2058 = vld [vmem:[%s2 + $0x1c0] sm:$0xff]
    %v2059 = vld [vmem:[%s2 + $0x1c8] sm:$0xff]
    %v2060 = vld [vmem:[%s2 + $0x1d0] sm:$0xff]
    %v2061 = vld [vmem:[%s2 + $0x1d8] sm:$0xff]
    %v2062 = vld [vmem:[%s2 + $0x1e0] sm:$0xff]
    %v2063 = vld [vmem:[%s2 + $0x1e8] sm:$0xff]
    %v2064 = vld [vmem:[%s2 + $0x1f0] sm:$0xff]
    %v2065 = vld [vmem:[%s2 + $0x1f8] sm:$0xff]
    %v2066 = vld [vmem:[%s4 + $0x1] sm:$0x1]
    %v2067 = vlaneseq
    %v2068 = vshrl.u32 %v2067, 7
    %v2069 = vsub.s32 0, %v2068
    %v2070 = vrot.slane %v2066, %v2069
    %2071 = vmatprep.subr.mxu0 0.0
    %2072 = vmatpush1.msra.mxu0 %v2034
    %2073 = vmatprep.subr.mxu0 0.0
    %2074 = vmatpush1.msra.mxu0 %v2035
    %2075 = vmatprep.subr.mxu0 0.0
    %2076 = vmatpush1.msra.mxu0 %v2036
    %2077 = vmatprep.subr.mxu0 0.0
    %2078 = vmatpush1.msra.mxu0 %v2037
    %2079 = vmatprep.subr.mxu0 0.0
    %2080 = vmatpush1.msra.mxu0 %v2038
    %2081 = vmatprep.subr.mxu0 0.0
    %2082 = vmatpush1.msra.mxu0 %v2039
    %2083 = vmatprep.subr.mxu0 0.0
    %2084 = vmatpush1.msra.mxu0 %v2040
    %2085 = vmatprep.subr.mxu0 0.0
    %2086 = vmatpush1.msra.mxu0 %v2041
    %2087 = vmatprep.subr.mxu0 0.0
    %2088 = vmatpush1.msra.mxu0 %v2042
    %2089 = vmatprep.subr.mxu0 0.0
    %2090 = vmatpush1.msra.mxu0 %v2043
    %2091 = vmatprep.subr.mxu0 0.0
    %2092 = vmatpush1.msra.mxu0 %v2044
    %2093 = vmatprep.subr.mxu0 0.0
    %2094 = vmatpush1.msra.mxu0 %v2045
    %2095 = vmatprep.subr.mxu0 0.0
    %2096 = vmatpush1.msra.mxu0 %v2046
    %2097 = vmatprep.subr.mxu0 0.0
    %2098 = vmatpush1.msra.mxu0 %v2047
    %2099 = vmatprep.subr.mxu0 0.0
    %2100 = vmatpush1.msra.mxu0 %v2048
    %2101 = vmatprep.subr.mxu0 0.0
    %2102 = vmatpush1.msra.mxu0 %v2049
    %2103 = vmatprep.subr.mxu0 0.0
    %2104 = vmatpush1.msra.mxu0 %v2050
    %2105 = vmatprep.subr.mxu0 0.0
    %2106 = vmatpush1.msra.mxu0 %v2051
    %2107 = vmatprep.subr.mxu0 0.0
    %2108 = vmatpush1.msra.mxu0 %v2052
    %2109 = vmatprep.subr.mxu0 0.0
    %2110 = vmatpush1.msra.mxu0 %v2053
    %2111 = vmatprep.subr.mxu0 0.0
    %2112 = vmatpush1.msra.mxu0 %v2054
    %2113 = vmatprep.subr.mxu0 0.0
    %2114 = vmatpush1.msra.mxu0 %v2055
    %2115 = vmatprep.subr.mxu0 0.0
    %2116 = vmatpush1.msra.mxu0 %v2056
    %2117 = vmatprep.subr.mxu0 0.0
    %2118 = vmatpush1.msra.mxu0 %v2057
    %2119 = vmatprep.subr.mxu0 0.0
    %2120 = vmatpush1.msra.mxu0 %v2058
    %2121 = vmatprep.subr.mxu0 0.0
    %2122 = vmatpush1.msra.mxu0 %v2059
    %2123 = vmatprep.subr.mxu0 0.0
    %2124 = vmatpush1.msra.mxu0 %v2060
    %2125 = vmatprep.subr.mxu0 0.0
    %2126 = vmatpush1.msra.mxu0 %v2061
    %2127 = vmatprep.subr.mxu0 0.0
    %2128 = vmatpush1.msra.mxu0 %v2062
    %2129 = vmatprep.subr.mxu0 0.0
    %2130 = vmatpush1.msra.mxu0 %v2063
    %2131 = vmatprep.subr.mxu0 0.0
    %2132 = vmatpush1.msra.mxu0 %v2064
    %2133 = vmatprep.subr.mxu0 0.0
    %2134 = vmatpush1.msra.mxu0 %v2065
    %2135 = vmatprep.mubr.f32.mxu0 %v1958
    %2136 = vmatmul.mubr.f32.gmra.mrb[0].mxu0 %v1648
    %v2137 = vpop.f32.mrb[0].mxu0
    %v2138 = vadd.f32 %v2070, %v2137
    %v2139 = vpop.f32.mrb[0].mxu0
    %2140 = vmatprep.mubr.f32.mxu0 %v2031
    %2141 = vmatmul.mubr.f32.gmra.mrb[0].mxu0 %v1721
    %v2142 = vpop.f32.mrb[0].mxu0
    %v2143 = vadd.f32 %v2070, %v2142
    %v2144 = vpop.f32.mrb[0].mxu0
    %2145 = vdwg.mxu0
    %v2146 = vsel %vm81, %v2138, 0.0
    %2147 = vadd.xlane.f32.xlu0 %v2146
    %v2148 = vpop.xlane.xlu0 %2147
    %v2149 = vsel %vm81, %v2143, 0.0
    %2150 = vadd.xlane.f32.xlu0 %v2149
    %v2151 = vpop.xlane.xlu0 %2150
    %v2152 = vmul.f32 %v2148, %v1077
    %v2153 = vmul.f32 %v2151, %v1077
    %v2154 = vsub.f32 %v2138, %v2152
    %v2155 = vsub.f32 %v2143, %v2153
    %v2156 = vmul.f32 %v2154, %v2154
    %v2157 = vmul.f32 %v2155, %v2155
    %v2158 = vsel %vm81, %v2156, 0.0
    %2159 = vadd.xlane.f32.xlu0 %v2158
    %v2160 = vpop.xlane.xlu0 %2159
    %v2161 = vsel %vm81, %v2157, 0.0
    %2162 = vadd.xlane.f32.xlu0 %v2161
    %v2163 = vpop.xlane.xlu0 %2162
    %v2164 = vmul.f32 %v2160, %v1077
    %v2165 = vmul.f32 %v2163, %v1077
    %v2166 = vld [vmem:[%s4 + $0x4] sm:$0x1]
    %v2167 = vld [vmem:[%s4 + $0x5] sm:$0x1]
    %v2168 = vadd.f32 %v2164, 1e-05
    %v2169 = vadd.f32 %v2165, 1e-05
    %v2170 = vrsqrt.pop %v2168
    %v2171 = vrsqrt.pop %v2169
    %v2172 = vmul.f32 %v2154, %v2170
    %v2173 = vmul.f32 %v2155, %v2171
    %v2174 = vlaneseq
    %v2175 = vshrl.u32 %v2174, 7
    %v2176 = vsub.s32 0, %v2175
    %v2177 = vrot.slane %v2166, %v2176
    %v2178 = vmul.f32 %v2172, %v2177
    %v2179 = vmul.f32 %v2173, %v2177
    %v2180 = vlaneseq
    %v2181 = vshrl.u32 %v2180, 7
    %v2182 = vsub.s32 0, %v2181
    %v2183 = vrot.slane %v2167, %v2182
    %v2184 = vadd.f32 %v2178, %v2183
    %v2185 = vadd.f32 %v2179, %v2183
    %v2186 = vadd.f32 %v2138, %v2184
    %v2187 = vadd.f32 %v2143, %v2185
    %v2188 = vld [vmem:[%s1 + $0x60] sm:$0xff]
    %v2189 = vld [vmem:[%s1 + $0xc8] sm:$0x3]
    %v2190 = vld [vmem:[%s4 + $0x8] sm:$0x1]
    %v2191 = vlaneseq
    %v2192 = vshrl.u32 %v2191, 7
    %v2193 = vsub.s32 0, %v2192
    %v2194 = vrot.slane %v2190, %v2193
    %v2196 = vsel %vm81, %v2186, 0
    %v2199 = vsel %vm81, %v2187, 0
    %v2202 = vsel %vm88, %v2189, 0
    %2204 = vmatprep.subr.mxu0 0.0
    %2205 = vmatpush1.msra.mxu0 %v2188
    %2206 = vmatprep.subr.mxu0 0.0
    %2207 = vmatpush1.msra.mxu0 %v2202
    %2208 = vmatprep.subr.mxu0 0.0
    %2209 = vmatpush1.msra.mxu0 0.0
    %2210 = vmatprep.subr.mxu0 0.0
    %2211 = vmatpush1.msra.mxu0 0.0
    %2212 = vmatprep.subr.mxu0 0.0
    %2213 = vmatpush1.msra.mxu0 0.0
    %2214 = vmatprep.subr.mxu0 0.0
    %2215 = vmatpush1.msra.mxu0 0.0
    %2216 = vmatprep.subr.mxu0 0.0
    %2217 = vmatpush1.msra.mxu0 0.0
    %2218 = vmatprep.subr.mxu0 0.0
    %2219 = vmatpush1.msra.mxu0 0.0
    %2220 = vmatprep.subr.mxu0 0.0
    %2221 = vmatpush1.msra.mxu0 0.0
    %2222 = vmatprep.subr.mxu0 0.0
    %2223 = vmatpush1.msra.mxu0 0.0
    %2224 = vmatprep.subr.mxu0 0.0
    %2225 = vmatpush1.msra.mxu0 0.0
    %2226 = vmatprep.subr.mxu0 0.0
    %2227 = vmatpush1.msra.mxu0 0.0
    %2228 = vmatprep.subr.mxu0 0.0
    %2229 = vmatpush1.msra.mxu0 0.0
    %2230 = vmatprep.subr.mxu0 0.0
    %2231 = vmatpush1.msra.mxu0 0.0
    %2232 = vmatprep.subr.mxu0 0.0
    %2233 = vmatpush1.msra.mxu0 0.0
    %2234 = vmatprep.subr.mxu0 0.0
    %2235 = vmatpush1.msra.mxu0 0.0
    %2236 = vmatprep.subr.mxu0 0.0
    %2237 = vmatpush1.msra.mxu0 0.0
    %2238 = vmatprep.subr.mxu0 0.0
    %2239 = vmatpush1.msra.mxu0 0.0
    %2240 = vmatprep.subr.mxu0 0.0
    %2241 = vmatpush1.msra.mxu0 0.0
    %2242 = vmatprep.subr.mxu0 0.0
    %2243 = vmatpush1.msra.mxu0 0.0
    %2244 = vmatprep.subr.mxu0 0.0
    %2245 = vmatpush1.msra.mxu0 0.0
    %2246 = vmatprep.subr.mxu0 0.0
    %2247 = vmatpush1.msra.mxu0 0.0
    %2248 = vmatprep.subr.mxu0 0.0
    %2249 = vmatpush1.msra.mxu0 0.0
    %2250 = vmatprep.subr.mxu0 0.0
    %2251 = vmatpush1.msra.mxu0 0.0
    %2252 = vmatprep.subr.mxu0 0.0
    %2253 = vmatpush1.msra.mxu0 0.0
    %2254 = vmatprep.subr.mxu0 0.0
    %2255 = vmatpush1.msra.mxu0 0.0
    %2256 = vmatprep.subr.mxu0 0.0
    %2257 = vmatpush1.msra.mxu0 0.0
    %2258 = vmatprep.subr.mxu0 0.0
    %2259 = vmatpush1.msra.mxu0 0.0
    %2260 = vmatprep.subr.mxu0 0.0
    %2261 = vmatpush1.msra.mxu0 0.0
    %2262 = vmatprep.subr.mxu0 0.0
    %2263 = vmatpush1.msra.mxu0 0.0
    %2264 = vmatprep.subr.mxu0 0.0
    %2265 = vmatpush1.msra.mxu0 0.0
    %2266 = vmatprep.subr.mxu0 0.0
    %2267 = vmatpush1.msra.mxu0 0.0
    %2268 = vmatprep.mubr.f32.mxu0 0.0
    %2269 = vmatmul.mubr.f32.gmra.mrb[0].mxu0 %v2196
    %v2270 = vpop.f32.mrb[0].mxu0
    %v2271 = vadd.f32 %v2194, %v2270
    %v2272 = vpop.f32.mrb[0].mxu0
    %2273 = vmatprep.mubr.f32.mxu0 0.0
    %2274 = vmatmul.mubr.f32.gmra.mrb[0].mxu0 %v2199
    %v2275 = vpop.f32.mrb[0].mxu0
    %v2276 = vadd.f32 %v2194, %v2275
    %v2277 = vpop.f32.mrb[0].mxu0
    %2278 = vdwg.mxu0
    %v2279 = vsel %vm81, %v2271, 0.0
    %2280 = vadd.xlane.f32.xlu0 %v2279
    %v2281 = vpop.xlane.xlu0 %2280
    %v2282 = vsel %vm81, %v2276, 0.0
    %2283 = vadd.xlane.f32.xlu0 %v2282
    %v2284 = vpop.xlane.xlu0 %2283
    %v2285 = vmul.f32 %v2281, %v1077
    %v2286 = vmul.f32 %v2284, %v1077
    %v2287 = vsub.f32 %v2271, %v2285
    %v2288 = vsub.f32 %v2276, %v2286
    %v2289 = vmul.f32 %v2287, %v2287
    %v2290 = vmul.f32 %v2288, %v2288
    %v2291 = vsel %vm81, %v2289, 0.0
    %2292 = vadd.xlane.f32.xlu0 %v2291
    %v2293 = vpop.xlane.xlu0 %2292
    %v2294 = vsel %vm81, %v2290, 0.0
    %2295 = vadd.xlane.f32.xlu0 %v2294
    %v2296 = vpop.xlane.xlu0 %2295
    %v2297 = vmul.f32 %v2293, %v1077
    %v2298 = vmul.f32 %v2296, %v1077
    %v2299 = vld [vmem:[%s4 + $0x6] sm:$0x1]
    %v2300 = vld [vmem:[%s4 + $0x7] sm:$0x1]
    %v2301 = vadd.f32 %v2297, 1e-05
    %v2302 = vadd.f32 %v2298, 1e-05
    %v2303 = vrsqrt.pop %v2301
    %v2304 = vrsqrt.pop %v2302
    %v2305 = vmul.f32 %v2287, %v2303
    %v2306 = vmul.f32 %v2288, %v2304
    %v2307 = vlaneseq
    %v2308 = vshrl.u32 %v2307, 7
    %v2309 = vsub.s32 0, %v2308
    %v2310 = vrot.slane %v2299, %v2309
    %v2311 = vmul.f32 %v2305, %v2310
    %v2312 = vmul.f32 %v2306, %v2310
    %v2313 = vlaneseq
    %v2314 = vshrl.u32 %v2313, 7
    %v2315 = vsub.s32 0, %v2314
    %v2316 = vrot.slane %v2300, %v2315
    %v2317 = vadd.f32 %v2311, %v2316
    %v2318 = vadd.f32 %v2312, %v2316
    %v2319 = vadd.f32 %v2271, %v2317
    %v2320 = vadd.f32 %v2276, %v2318
    %2321 = vst.msk [vmem:[#allocation5] sm:$0xff] %vm81, %v2319
    %2322 = vst.msk [vmem:[#allocation5 + $0x8] sm:$0xff] %vm81, %v2320
    // Predicated region
    $region26: #{tpu_custom_call.1} parent=1 // pred_check
      _
    $region27: #{tpu_custom_call.1} parent=1 // pred_check_branch
      %2324 = sbr.rel (0) target = $region29
    $region28: #{tpu_custom_call.1} parent=1 // pred_region
      %s2326 = ssub.s32 256, 256
      %2327 = vsyncadd [#allocation4], %s2326
      %s2328 = sshll.u32 [#allocation5], 4
      %s2329 = int_to_ptr.vmem [resolvable:$true] %s2328
      %2334 = dma.vmem_to_hbm [thread:$0]  %s2329, 256, %s5, [#allocation4], 128, 128, 8
    $region29: #{tpu_custom_call.1} parent=1 // pred_fallthru
      _
    // Predicated region
    $region30: #{tpu_custom_call.1} parent=1 // pred_check
      _
    $region31: #{tpu_custom_call.1} parent=1 // pred_check_branch
      %2336 = sbr.rel (0) target = $region33
    $region32: #{tpu_custom_call.1} parent=1 // pred_region
      %2337 = dma.done [#allocation4], 256
    $region33: #{tpu_custom_call.1} parent=1 // pred_fallthru
      _
    %2338 = vsyncpa [#allocation3], 1
    %2339 = vsyncpa [#allocation4], 1

</llo_original>
